<compile_context>
chip_gen: v7x
topology: tpu7x:2x2x1
jax: 0.10.0
libtpu: 0.0.40
codegen_flags: <defaults>
</compile_context>

<pallas_src>
import math

import jax
import jax.numpy as jnp
import numpy as np
from jax.experimental import pallas as pl
from jax.experimental.pallas import tpu as pltpu

# ----------------------------- model dims (small, consistent with module) ---
B = 2         # batch
S = 8         # sequence length (tokens)
E = 32        # embedding_dim
H = 4         # num_heads
DH = E // H   # head dim
M = 64        # mlp_size
N = B * S     # total tokens
EP = 128      # lane-padded embedding width
MP = 128      # lane-padded MLP width
EPS = 1e-6    # LayerNorm eps


# ----------------------------- in-kernel math helpers ------------------------
def _erf_poly(z):
    # Abramowitz & Stegun 7.1.26, |err| <= 1.5e-7.  Uses only exp/mul/add/div/
    # where, which lower cleanly in Mosaic.
    a1, a2, a3, a4, a5 = (0.254829592, -0.284496736, 1.421413741,
                          -1.453152027, 1.061405429)
    p = 0.3275911
    az = jnp.abs(z)
    t = 1.0 / (1.0 + p * az)
    poly = ((((a5 * t + a4) * t + a3) * t + a2) * t + a1) * t
    y = 1.0 - poly * jnp.exp(-az * az)
    return jnp.where(z >= 0.0, y, -y)


def _gelu_exact(x):
    # nn.GELU() default = exact erf formulation (kept in f32).
    return 0.5 * x * (1.0 + _erf_poly(x * (1.0 / math.sqrt(2.0))))


def _layernorm_padded(x, gamma, beta):
    # x is lane-padded (rows, EP) with zeros beyond lane E.  sum() is
    # unaffected by the zero padding and var = E[x^2] - mu^2 keeps the padded
    # (x - mu) lanes out of the statistics.  gamma/beta are zero beyond lane E
    # so the padded lanes of the result are exactly 0.
    mu = jnp.sum(x, axis=-1, keepdims=True) * (1.0 / E)
    ex2 = jnp.sum(x * x, axis=-1, keepdims=True) * (1.0 / E)
    var = ex2 - mu * mu
    return (x - mu) * jax.lax.rsqrt(var + EPS) * gamma + beta


# ----------------------------- kernel ----------------------------------------
def encoder_block_kernel(
    x_ref,      # (S, EP)        f32  one sequence, lane-padded
    wqkv_ref,   # (3, H, EP, DH) bf16 per-head Q/K/V weights (scale folded in Q)
    wo_ref,     # (H, DH, EP)    bf16 per-head rows of the out-projection
    w1_ref,     # (EP, MP)       bf16 MLP fc1 (zero-padded)
    w2_ref,     # (MP, EP)       bf16 MLP fc2 (zero-padded)
    bqkv_ref,   # (3, H, 1, DH)  f32  per-head Q/K/V biases (Q bias pre-scaled)
    pv_ref,     # (7, EP)        f32  [g1, be1, g2, be2, bo, bb1, bb2] rows
    o_ref,      # (S, EP)        f32
):
    xb = x_ref[...]                                  # (S, EP)
    pv = pv_ref[...]                                 # (7, EP)
    g1, be1 = pv[0:1], pv[1:2]
    g2, be2 = pv[2:3], pv[3:4]
    bo, bb1, bb2 = pv[4:5], pv[5:6], pv[6:7]

    # ---------------- LayerNorm 1 ----------------
    hb = _layernorm_padded(xb, g1, be1)              # (S, EP) f32
    hb16 = hb.astype(jnp.bfloat16)
    hh = jnp.broadcast_to(hb16[None], (H, S, EP))    # head-batched (leading bcast)

    # ---------------- per-head Q/K/V projections ----------------
    # Head split lives in the weight layout (prepared in the wrapper); no
    # in-kernel lane slicing / repacking.
    def proj(idx):
        y = jnp.einsum("hse,hed->hsd", hh, wqkv_ref[idx],
                       preferred_element_type=jnp.float32)            # (H, S, DH)
        return y + bqkv_ref[idx]                                      # + (H,1,DH)

    qh = proj(0)        # 1/sqrt(DH) already folded into Wq / bq
    kh = proj(1)
    vh = proj(2)

    # ---------------- attention (per head, S x S) ----------------
    s = jnp.einsum("hqd,hkd->hqk",
                   qh.astype(jnp.bfloat16), kh.astype(jnp.bfloat16),
                   preferred_element_type=jnp.float32)                # (H, S, S)
    s = s - jnp.max(s, axis=-1, keepdims=True)
    p = jnp.exp(s)
    p = p / jnp.sum(p, axis=-1, keepdims=True)       # exact softmax normalization
    oh = jnp.einsum("hqk,hkd->hqd",
                    p.astype(jnp.bfloat16), vh.astype(jnp.bfloat16),
                    preferred_element_type=jnp.float32)               # (H, S, DH)

    # ---------------- out-projection: per-head matmul + reduce over heads ----
    po = jnp.einsum("hqd,hde->hqe",
                    oh.astype(jnp.bfloat16), wo_ref[...],
                    preferred_element_type=jnp.float32)               # (H, S, EP)
    mha = jnp.sum(po, axis=0) + bo                                    # (S, EP)
    x1 = mha + xb                                                     # residual 1

    # ---------------- LayerNorm 2 + MLP ----------------
    h2 = _layernorm_padded(x1, g2, be2)
    f1 = _gelu_exact(jnp.dot(h2.astype(jnp.bfloat16), w1_ref[...],
                             preferred_element_type=jnp.float32) + bb1)   # (S, MP)
    f2 = jnp.dot(f1.astype(jnp.bfloat16), w2_ref[...],
                 preferred_element_type=jnp.float32) + bb2                # (S, EP)

    o_ref[...] = f2 + x1     # lane-dense (S, 128) -> unmasked store


# ----------------------------- wrapper ---------------------------------------
@jax.jit
def transformer_encoder_block(x, params):
    """x: (B, S, E) f32. params: dict of weights (see _init_params)."""
    scale = 1.0 / math.sqrt(DH)

    def per_head_in(w):      # (E, E) stored (in, out) -> (H, E, DH)
        return jnp.transpose(w.reshape(E, H, DH), (1, 0, 2))

    wq_h = per_head_in(params["wq"]) * scale          # fold softmax scale into Wq
    wk_h = per_head_in(params["wk"])
    wv_h = per_head_in(params["wv"])
    wqkv = jnp.stack([wq_h, wk_h, wv_h], axis=0)                       # (3, H, E, DH)
    wqkv = jnp.pad(wqkv, ((0, 0), (0, 0), (0, EP - E), (0, 0))).astype(jnp.bfloat16)

    wo_h = jnp.pad(params["wo"].reshape(H, DH, E),
                   ((0, 0), (0, 0), (0, EP - E))).astype(jnp.bfloat16)  # (H, DH, EP)
    w1 = jnp.pad(params["w1"], ((0, EP - E), (0, MP - M))).astype(jnp.bfloat16)
    w2 = jnp.pad(params["w2"], ((0, MP - M), (0, EP - E))).astype(jnp.bfloat16)

    bqkv = jnp.stack([params["bq"][0] * scale, params["bk"][0], params["bv"][0]],
                     axis=0).reshape(3, H, 1, DH)                       # f32

    def row(v, width):       # one zero-padded 128-lane sublane row per vector
        return jnp.pad(v[0], (0, 128 - width))

    pvec = jnp.stack([row(params["g1"], E), row(params["be1"], E),
                      row(params["g2"], E), row(params["be2"], E),
                      row(params["bo"], E), row(params["bb1"], M),
                      row(params["bb2"], E)], axis=0)                   # (7, 128) f32

    x_p = jnp.pad(x.reshape(N, E), ((0, 0), (0, EP - E)))               # (N, 128) f32

    zero2 = lambda b: (0, 0)
    zero3 = lambda b: (0, 0, 0)
    zero4 = lambda b: (0, 0, 0, 0)

    out = pl.pallas_call(
        encoder_block_kernel,
        out_shape=jax.ShapeDtypeStruct((N, EP), jnp.float32),
        grid=(B,),                                     # one sequence per step
        in_specs=[
            pl.BlockSpec((S, EP), lambda b: (b, 0)),   # tokens: per-sequence tile
            pl.BlockSpec((3, H, EP, DH), zero4),       # weights: constant block ->
            pl.BlockSpec((H, DH, EP), zero3),          # stay VMEM-resident, no re-DMA
            pl.BlockSpec((EP, MP), zero2),
            pl.BlockSpec((MP, EP), zero2),
            pl.BlockSpec((3, H, 1, DH), zero4),
            pl.BlockSpec((7, EP), zero2),
        ],
        out_specs=pl.BlockSpec((S, EP), lambda b: (b, 0)),
        compiler_params=pltpu.CompilerParams(
            dimension_semantics=("parallel",)),        # v7x: one sequence per TC
    )(x_p, wqkv, wo_h, w1, w2, bqkv, pvec)

    return out[:, :E].reshape(B, S, E)


# ----------------------------- params / reference ----------------------------
def _init_params(key):
    """Synthetic weights with the module's shapes, stored pre-transposed to
    (in, out); biases / LN affine as (1, dim) rows."""
    ks = jax.random.split(key, 12)
    scale = 0.05
    return {
        "wq": scale * jax.random.normal(ks[0], (E, E), jnp.float32),
        "wk": scale * jax.random.normal(ks[1], (E, E), jnp.float32),
        "wv": scale * jax.random.normal(ks[2], (E, E), jnp.float32),
        "bq": scale * jax.random.normal(ks[3], (1, E), jnp.float32),
        "bk": scale * jax.random.normal(ks[4], (1, E), jnp.float32),
        "bv": scale * jax.random.normal(ks[5], (1, E), jnp.float32),
        "wo": scale * jax.random.normal(ks[6], (E, E), jnp.float32),
        "bo": scale * jax.random.normal(ks[7], (1, E), jnp.float32),
        "g1": jnp.ones((1, E), jnp.float32),
        "be1": jnp.zeros((1, E), jnp.float32),
        "g2": jnp.ones((1, E), jnp.float32),
        "be2": jnp.zeros((1, E), jnp.float32),
        "w1": scale * jax.random.normal(ks[8], (E, M), jnp.float32),
        "bb1": scale * jax.random.normal(ks[9], (1, M), jnp.float32),
        "w2": scale * jax.random.normal(ks[10], (M, E), jnp.float32),
        "bb2": scale * jax.random.normal(ks[11], (1, E), jnp.float32),
    }


def _reference(x, p):
    """Plain-JAX f32 reference reproducing the PyTorch forward (dropout=0)."""
    def ln(z, g, b):
        mu = jnp.mean(z, axis=-1, keepdims=True)
        var = jnp.mean((z - mu) ** 2, axis=-1, keepdims=True)
        return (z - mu) / jnp.sqrt(var + EPS) * g + b

    def gelu(z):
        return 0.5 * z * (1.0 + jax.lax.erf(z / math.sqrt(2.0)))

    h = ln(x, p["g1"][0], p["be1"][0])
    q = h @ p["wq"] + p["bq"][0]
    k = h @ p["wk"] + p["bk"][0]
    v = h @ p["wv"] + p["bv"][0]
    q = q.reshape(B, S, H, DH).transpose(0, 2, 1, 3)
    k = k.reshape(B, S, H, DH).transpose(0, 2, 1, 3)
    v = v.reshape(B, S, H, DH).transpose(0, 2, 1, 3)
    s = jnp.einsum("bhqd,bhkd->bhqk", q, k) / math.sqrt(DH)
    pattn = jax.nn.softmax(s, axis=-1)
    o = jnp.einsum("bhqk,bhkd->bhqd", pattn, v).transpose(0, 2, 1, 3).reshape(B, S, E)
    mha = o @ p["wo"] + p["bo"][0]
    x1 = mha + x
    h2 = ln(x1, p["g2"][0], p["be2"][0])
    f1 = gelu(h2 @ p["w1"] + p["bb1"][0])
    f2 = f1 @ p["w2"] + p["bb2"][0]
    return f2 + x1


if __name__ == "__main__":
    key = jax.random.PRNGKey(0)
    kx, kp = jax.random.split(key)
    x = jax.random.normal(kx, (B, S, E), jnp.float32)
    params = _init_params(kp)

    out = jax.block_until_ready(transformer_encoder_block(x, params))
    ref = _reference(x, params)

    # bf16 matmul operands (f32 accumulation) and the erf polynomial introduce
    # ~1e-3 absolute deviation vs the pure-f32 reference; 2e-2 is a wide margin.
    np.testing.assert_allclose(np.asarray(out), np.asarray(ref), rtol=2e-2, atol=2e-2)

    print("KERNEL_OK")
</pallas_src>

<mosaic_0001>
module attributes {stable_mosaic.version = 11 : i64} {
  func.func @encoder_block_kernel(%arg0: i32, %arg1: memref<8x128xf32, #tpu.memory_space<vmem>>, %arg2: memref<3x4x128x8xbf16, #tpu.memory_space<vmem>>, %arg3: memref<4x8x128xbf16, #tpu.memory_space<vmem>>, %arg4: memref<128x128xbf16, #tpu.memory_space<vmem>>, %arg5: memref<128x128xbf16, #tpu.memory_space<vmem>>, %arg6: memref<3x4x1x8xf32, #tpu.memory_space<vmem>>, %arg7: memref<7x128xf32, #tpu.memory_space<vmem>>, %arg8: memref<8x128xf32, #tpu.memory_space<vmem>>) attributes {dimension_semantics = [#tpu.dimension_semantics<parallel>], iteration_bounds = array<i64: 2>, scalar_prefetch = 0 : i64, scratch_operands = 0 : i64, tpu.core_type = #tpu.core_type<tc>, window_params = [{transform_indices = @transform_0, window_bounds = array<i64: 8, 128>}, {pipeline_mode = #tpu.pipeline_mode<synchronous>, transform_indices = @transform_1, window_bounds = array<i64: 3, 4, 128, 8>}, {pipeline_mode = #tpu.pipeline_mode<synchronous>, transform_indices = @transform_2, window_bounds = array<i64: 4, 8, 128>}, {pipeline_mode = #tpu.pipeline_mode<synchronous>, transform_indices = @transform_3, window_bounds = array<i64: 128, 128>}, {pipeline_mode = #tpu.pipeline_mode<synchronous>, transform_indices = @transform_4, window_bounds = array<i64: 128, 128>}, {pipeline_mode = #tpu.pipeline_mode<synchronous>, transform_indices = @transform_5, window_bounds = array<i64: 3, 4, 1, 8>}, {pipeline_mode = #tpu.pipeline_mode<synchronous>, transform_indices = @transform_6, window_bounds = array<i64: 7, 128>}, {transform_indices = @transform_7, window_bounds = array<i64: 8, 128>}]} {
    %c0 = arith.constant 0 : index
    %c0_0 = arith.constant 0 : index
    %0 = vector.load %arg1[%c0, %c0_0] : memref<8x128xf32, #tpu.memory_space<vmem>>, vector<8x128xf32>
    %c0_1 = arith.constant 0 : index
    %c0_2 = arith.constant 0 : index
    %1 = vector.load %arg7[%c0_1, %c0_2] : memref<7x128xf32, #tpu.memory_space<vmem>>, vector<7x128xf32>
    %2 = vector.extract_strided_slice %1 {offsets = [0, 0], sizes = [1, 128], strides = [1, 1]} : vector<7x128xf32> to vector<1x128xf32>
    %3 = vector.extract_strided_slice %1 {offsets = [1, 0], sizes = [1, 128], strides = [1, 1]} : vector<7x128xf32> to vector<1x128xf32>
    %4 = vector.extract_strided_slice %1 {offsets = [2, 0], sizes = [1, 128], strides = [1, 1]} : vector<7x128xf32> to vector<1x128xf32>
    %5 = vector.extract_strided_slice %1 {offsets = [3, 0], sizes = [1, 128], strides = [1, 1]} : vector<7x128xf32> to vector<1x128xf32>
    %6 = vector.extract_strided_slice %1 {offsets = [4, 0], sizes = [1, 128], strides = [1, 1]} : vector<7x128xf32> to vector<1x128xf32>
    %7 = vector.extract_strided_slice %1 {offsets = [5, 0], sizes = [1, 128], strides = [1, 1]} : vector<7x128xf32> to vector<1x128xf32>
    %8 = vector.extract_strided_slice %1 {offsets = [6, 0], sizes = [1, 128], strides = [1, 1]} : vector<7x128xf32> to vector<1x128xf32>
    %cst = arith.constant dense<0.000000e+00> : vector<8xf32>
    %9 = vector.multi_reduction <add>, %0, %cst [1] : vector<8x128xf32> to vector<8xf32>
    %10 = vector.shape_cast %9 : vector<8xf32> to vector<8x1xf32>
    %cst_3 = arith.constant 3.125000e-02 : f32
    %11 = vector.broadcast %cst_3 : f32 to vector<8x1xf32>
    %12 = arith.mulf %10, %11 : vector<8x1xf32>
    %13 = arith.mulf %0, %0 : vector<8x128xf32>
    %cst_4 = arith.constant dense<0.000000e+00> : vector<8xf32>
    %14 = vector.multi_reduction <add>, %13, %cst_4 [1] : vector<8x128xf32> to vector<8xf32>
    %15 = vector.shape_cast %14 : vector<8xf32> to vector<8x1xf32>
    %cst_5 = arith.constant 3.125000e-02 : f32
    %16 = vector.broadcast %cst_5 : f32 to vector<8x1xf32>
    %17 = arith.mulf %15, %16 : vector<8x1xf32>
    %18 = arith.mulf %12, %12 : vector<8x1xf32>
    %19 = arith.subf %17, %18 : vector<8x1xf32>
    %20 = vector.broadcast %12 : vector<8x1xf32> to vector<8x128xf32>
    %21 = arith.subf %0, %20 : vector<8x128xf32>
    %cst_6 = arith.constant 9.99999997E-7 : f32
    %22 = vector.broadcast %cst_6 : f32 to vector<8x1xf32>
    %23 = arith.addf %19, %22 : vector<8x1xf32>
    %24 = math.rsqrt %23 : vector<8x1xf32>
    %25 = vector.broadcast %24 : vector<8x1xf32> to vector<8x128xf32>
    %26 = arith.mulf %21, %25 : vector<8x128xf32>
    %27 = vector.broadcast %2 : vector<1x128xf32> to vector<8x128xf32>
    %28 = arith.mulf %26, %27 : vector<8x128xf32>
    %29 = vector.broadcast %3 : vector<1x128xf32> to vector<8x128xf32>
    %30 = arith.addf %28, %29 : vector<8x128xf32>
    %31 = arith.truncf %30 : vector<8x128xf32> to vector<8x128xbf16>
    %32 = vector.shape_cast %31 : vector<8x128xbf16> to vector<1x8x128xbf16>
    %33 = vector.shape_cast %32 : vector<1x8x128xbf16> to vector<1x8x128xbf16>
    %34 = vector.broadcast %33 : vector<1x8x128xbf16> to vector<4x8x128xbf16>
    %c0_7 = arith.constant 0 : index
    %c0_8 = arith.constant 0 : index
    %c0_9 = arith.constant 0 : index
    %c0_10 = arith.constant 0 : index
    %35 = vector.load %arg2[%c0_7, %c0_8, %c0_9, %c0_10] : memref<3x4x128x8xbf16, #tpu.memory_space<vmem>>, vector<1x4x128x8xbf16>
    %36 = vector.shape_cast %35 : vector<1x4x128x8xbf16> to vector<4x128x8xbf16>
    "tpu.trace_start"() <{level = 10 : i32, message = "hse,hed->hsd"}> : () -> ()
    %cst_11 = arith.constant dense<0.000000e+00> : vector<4x8x8xf32>
    %37 = tpu.matmul %34, %36, %cst_11 {dimension_numbers = #tpu.dot_dimension_numbers<[2], [1], [1], [2], [0, 0, 0, 1, 1, 2], [0], [0]>} : vector<4x8x128xbf16>, vector<4x128x8xbf16>, vector<4x8x8xf32> -> vector<4x8x8xf32>
    "tpu.trace_stop"() : () -> ()
    %c0_12 = arith.constant 0 : index
    %c0_13 = arith.constant 0 : index
    %c0_14 = arith.constant 0 : index
    %c0_15 = arith.constant 0 : index
    %38 = vector.load %arg6[%c0_12, %c0_13, %c0_14, %c0_15] : memref<3x4x1x8xf32, #tpu.memory_space<vmem>>, vector<1x4x1x8xf32>
    %39 = vector.shape_cast %38 : vector<1x4x1x8xf32> to vector<4x1x8xf32>
    %40 = vector.broadcast %39 : vector<4x1x8xf32> to vector<4x8x8xf32>
    %41 = arith.addf %37, %40 : vector<4x8x8xf32>
    %c1 = arith.constant 1 : index
    %c0_16 = arith.constant 0 : index
    %c0_17 = arith.constant 0 : index
    %c0_18 = arith.constant 0 : index
    %42 = vector.load %arg2[%c1, %c0_16, %c0_17, %c0_18] : memref<3x4x128x8xbf16, #tpu.memory_space<vmem>>, vector<1x4x128x8xbf16>
    %43 = vector.shape_cast %42 : vector<1x4x128x8xbf16> to vector<4x128x8xbf16>
    "tpu.trace_start"() <{level = 10 : i32, message = "hse,hed->hsd"}> : () -> ()
    %cst_19 = arith.constant dense<0.000000e+00> : vector<4x8x8xf32>
    %44 = tpu.matmul %34, %43, %cst_19 {dimension_numbers = #tpu.dot_dimension_numbers<[2], [1], [1], [2], [0, 0, 0, 1, 1, 2], [0], [0]>} : vector<4x8x128xbf16>, vector<4x128x8xbf16>, vector<4x8x8xf32> -> vector<4x8x8xf32>
    "tpu.trace_stop"() : () -> ()
    %c1_20 = arith.constant 1 : index
    %c0_21 = arith.constant 0 : index
    %c0_22 = arith.constant 0 : index
    %c0_23 = arith.constant 0 : index
    %45 = vector.load %arg6[%c1_20, %c0_21, %c0_22, %c0_23] : memref<3x4x1x8xf32, #tpu.memory_space<vmem>>, vector<1x4x1x8xf32>
    %46 = vector.shape_cast %45 : vector<1x4x1x8xf32> to vector<4x1x8xf32>
    %47 = vector.broadcast %46 : vector<4x1x8xf32> to vector<4x8x8xf32>
    %48 = arith.addf %44, %47 : vector<4x8x8xf32>
    %c2 = arith.constant 2 : index
    %c0_24 = arith.constant 0 : index
    %c0_25 = arith.constant 0 : index
    %c0_26 = arith.constant 0 : index
    %49 = vector.load %arg2[%c2, %c0_24, %c0_25, %c0_26] : memref<3x4x128x8xbf16, #tpu.memory_space<vmem>>, vector<1x4x128x8xbf16>
    %50 = vector.shape_cast %49 : vector<1x4x128x8xbf16> to vector<4x128x8xbf16>
    "tpu.trace_start"() <{level = 10 : i32, message = "hse,hed->hsd"}> : () -> ()
    %cst_27 = arith.constant dense<0.000000e+00> : vector<4x8x8xf32>
    %51 = tpu.matmul %34, %50, %cst_27 {dimension_numbers = #tpu.dot_dimension_numbers<[2], [1], [1], [2], [0, 0, 0, 1, 1, 2], [0], [0]>} : vector<4x8x128xbf16>, vector<4x128x8xbf16>, vector<4x8x8xf32> -> vector<4x8x8xf32>
    "tpu.trace_stop"() : () -> ()
    %c2_28 = arith.constant 2 : index
    %c0_29 = arith.constant 0 : index
    %c0_30 = arith.constant 0 : index
    %c0_31 = arith.constant 0 : index
    %52 = vector.load %arg6[%c2_28, %c0_29, %c0_30, %c0_31] : memref<3x4x1x8xf32, #tpu.memory_space<vmem>>, vector<1x4x1x8xf32>
    %53 = vector.shape_cast %52 : vector<1x4x1x8xf32> to vector<4x1x8xf32>
    %54 = vector.broadcast %53 : vector<4x1x8xf32> to vector<4x8x8xf32>
    %55 = arith.addf %51, %54 : vector<4x8x8xf32>
    %56 = arith.truncf %41 : vector<4x8x8xf32> to vector<4x8x8xbf16>
    %57 = arith.truncf %48 : vector<4x8x8xf32> to vector<4x8x8xbf16>
    "tpu.trace_start"() <{level = 10 : i32, message = "hqd,hkd->hqk"}> : () -> ()
    %cst_32 = arith.constant dense<0.000000e+00> : vector<4x8x8xf32>
    %58 = tpu.matmul %56, %57, %cst_32 {dimension_numbers = #tpu.dot_dimension_numbers<[2], [2], [1], [1], [0, 0, 0, 1, 1, 1], [0], [0]>} : vector<4x8x8xbf16>, vector<4x8x8xbf16>, vector<4x8x8xf32> -> vector<4x8x8xf32>
    "tpu.trace_stop"() : () -> ()
    %cst_33 = arith.constant dense<0xFF800000> : vector<4x8xf32>
    %59 = vector.multi_reduction <maximumf>, %58, %cst_33 [2] : vector<4x8x8xf32> to vector<4x8xf32>
    %60 = vector.shape_cast %59 : vector<4x8xf32> to vector<4x8x1xf32>
    %61 = vector.broadcast %60 : vector<4x8x1xf32> to vector<4x8x8xf32>
    %62 = arith.subf %58, %61 : vector<4x8x8xf32>
    %63 = math.exp %62 : vector<4x8x8xf32>
    %cst_34 = arith.constant dense<0.000000e+00> : vector<4x8xf32>
    %64 = vector.multi_reduction <add>, %63, %cst_34 [2] : vector<4x8x8xf32> to vector<4x8xf32>
    %65 = vector.shape_cast %64 : vector<4x8xf32> to vector<4x8x1xf32>
    %66 = vector.broadcast %65 : vector<4x8x1xf32> to vector<4x8x8xf32>
    %67 = arith.divf %63, %66 : vector<4x8x8xf32>
    %68 = arith.truncf %67 : vector<4x8x8xf32> to vector<4x8x8xbf16>
    %69 = arith.truncf %55 : vector<4x8x8xf32> to vector<4x8x8xbf16>
    "tpu.trace_start"() <{level = 10 : i32, message = "hqk,hkd->hqd"}> : () -> ()
    %cst_35 = arith.constant dense<0.000000e+00> : vector<4x8x8xf32>
    %70 = tpu.matmul %68, %69, %cst_35 {dimension_numbers = #tpu.dot_dimension_numbers<[2], [1], [1], [2], [0, 0, 0, 1, 1, 2], [0], [0]>} : vector<4x8x8xbf16>, vector<4x8x8xbf16>, vector<4x8x8xf32> -> vector<4x8x8xf32>
    "tpu.trace_stop"() : () -> ()
    %71 = arith.truncf %70 : vector<4x8x8xf32> to vector<4x8x8xbf16>
    %c0_36 = arith.constant 0 : index
    %c0_37 = arith.constant 0 : index
    %c0_38 = arith.constant 0 : index
    %72 = vector.load %arg3[%c0_36, %c0_37, %c0_38] : memref<4x8x128xbf16, #tpu.memory_space<vmem>>, vector<4x8x128xbf16>
    "tpu.trace_start"() <{level = 10 : i32, message = "hqd,hde->hqe"}> : () -> ()
    %cst_39 = arith.constant dense<0.000000e+00> : vector<4x8x128xf32>
    %73 = tpu.matmul %71, %72, %cst_39 {dimension_numbers = #tpu.dot_dimension_numbers<[2], [1], [1], [2], [0, 0, 0, 1, 1, 2], [0], [0]>} : vector<4x8x8xbf16>, vector<4x8x128xbf16>, vector<4x8x128xf32> -> vector<4x8x128xf32>
    "tpu.trace_stop"() : () -> ()
    %cst_40 = arith.constant dense<0.000000e+00> : vector<8x128xf32>
    %74 = vector.multi_reduction <add>, %73, %cst_40 [0] : vector<4x8x128xf32> to vector<8x128xf32>
    %75 = vector.broadcast %6 : vector<1x128xf32> to vector<8x128xf32>
    %76 = arith.addf %74, %75 : vector<8x128xf32>
    %77 = arith.addf %76, %0 : vector<8x128xf32>
    %cst_41 = arith.constant dense<0.000000e+00> : vector<8xf32>
    %78 = vector.multi_reduction <add>, %77, %cst_41 [1] : vector<8x128xf32> to vector<8xf32>
    %79 = vector.shape_cast %78 : vector<8xf32> to vector<8x1xf32>
    %cst_42 = arith.constant 3.125000e-02 : f32
    %80 = vector.broadcast %cst_42 : f32 to vector<8x1xf32>
    %81 = arith.mulf %79, %80 : vector<8x1xf32>
    %82 = arith.mulf %77, %77 : vector<8x128xf32>
    %cst_43 = arith.constant dense<0.000000e+00> : vector<8xf32>
    %83 = vector.multi_reduction <add>, %82, %cst_43 [1] : vector<8x128xf32> to vector<8xf32>
    %84 = vector.shape_cast %83 : vector<8xf32> to vector<8x1xf32>
    %cst_44 = arith.constant 3.125000e-02 : f32
    %85 = vector.broadcast %cst_44 : f32 to vector<8x1xf32>
    %86 = arith.mulf %84, %85 : vector<8x1xf32>
    %87 = arith.mulf %81, %81 : vector<8x1xf32>
    %88 = arith.subf %86, %87 : vector<8x1xf32>
    %89 = vector.broadcast %81 : vector<8x1xf32> to vector<8x128xf32>
    %90 = arith.subf %77, %89 : vector<8x128xf32>
    %cst_45 = arith.constant 9.99999997E-7 : f32
    %91 = vector.broadcast %cst_45 : f32 to vector<8x1xf32>
    %92 = arith.addf %88, %91 : vector<8x1xf32>
    %93 = math.rsqrt %92 : vector<8x1xf32>
    %94 = vector.broadcast %93 : vector<8x1xf32> to vector<8x128xf32>
    %95 = arith.mulf %90, %94 : vector<8x128xf32>
    %96 = vector.broadcast %4 : vector<1x128xf32> to vector<8x128xf32>
    %97 = arith.mulf %95, %96 : vector<8x128xf32>
    %98 = vector.broadcast %5 : vector<1x128xf32> to vector<8x128xf32>
    %99 = arith.addf %97, %98 : vector<8x128xf32>
    %100 = arith.truncf %99 : vector<8x128xf32> to vector<8x128xbf16>
    %c0_46 = arith.constant 0 : index
    %c0_47 = arith.constant 0 : index
    %101 = vector.load %arg4[%c0_46, %c0_47] : memref<128x128xbf16, #tpu.memory_space<vmem>>, vector<128x128xbf16>
    %cst_48 = arith.constant dense<0.000000e+00> : vector<8x128xf32>
    %102 = tpu.matmul %100, %101, %cst_48 {dimension_numbers = #tpu.dot_dimension_numbers<[1], [0], [0], [1], [0, 0, 1, 1], [], []>} : vector<8x128xbf16>, vector<128x128xbf16>, vector<8x128xf32> -> vector<8x128xf32>
    %103 = vector.broadcast %7 : vector<1x128xf32> to vector<8x128xf32>
    %104 = arith.addf %102, %103 : vector<8x128xf32>
    %cst_49 = arith.constant 5.000000e-01 : f32
    %105 = vector.broadcast %cst_49 : f32 to vector<8x128xf32>
    %106 = arith.mulf %105, %104 : vector<8x128xf32>
    %cst_50 = arith.constant 0.707106769 : f32
    %107 = vector.broadcast %cst_50 : f32 to vector<8x128xf32>
    %108 = arith.mulf %104, %107 : vector<8x128xf32>
    %109 = math.absf %108 : vector<8x128xf32>
    %cst_51 = arith.constant 0.327591091 : f32
    %110 = vector.broadcast %cst_51 : f32 to vector<8x128xf32>
    %111 = arith.mulf %110, %109 : vector<8x128xf32>
    %cst_52 = arith.constant 1.000000e+00 : f32
    %112 = vector.broadcast %cst_52 : f32 to vector<8x128xf32>
    %113 = arith.addf %112, %111 : vector<8x128xf32>
    %cst_53 = arith.constant 1.000000e+00 : f32
    %114 = vector.broadcast %cst_53 : f32 to vector<8x128xf32>
    %115 = arith.divf %114, %113 : vector<8x128xf32>
    %cst_54 = arith.constant 1.06140542 : f32
    %116 = vector.broadcast %cst_54 : f32 to vector<8x128xf32>
    %117 = arith.mulf %116, %115 : vector<8x128xf32>
    %cst_55 = arith.constant -1.45315206 : f32
    %118 = vector.broadcast %cst_55 : f32 to vector<8x128xf32>
    %119 = arith.addf %117, %118 : vector<8x128xf32>
    %120 = arith.mulf %119, %115 : vector<8x128xf32>
    %cst_56 = arith.constant 1.42141378 : f32
    %121 = vector.broadcast %cst_56 : f32 to vector<8x128xf32>
    %122 = arith.addf %120, %121 : vector<8x128xf32>
    %123 = arith.mulf %122, %115 : vector<8x128xf32>
    %cst_57 = arith.constant -0.284496725 : f32
    %124 = vector.broadcast %cst_57 : f32 to vector<8x128xf32>
    %125 = arith.addf %123, %124 : vector<8x128xf32>
    %126 = arith.mulf %125, %115 : vector<8x128xf32>
    %cst_58 = arith.constant 0.254829586 : f32
    %127 = vector.broadcast %cst_58 : f32 to vector<8x128xf32>
    %128 = arith.addf %126, %127 : vector<8x128xf32>
    %129 = arith.mulf %128, %115 : vector<8x128xf32>
    %cst_59 = arith.constant 0.000000e+00 : f32
    %130 = vector.broadcast %cst_59 : f32 to vector<8x128xf32>
    %131 = arith.subf %130, %109 : vector<8x128xf32>
    %132 = arith.mulf %131, %109 : vector<8x128xf32>
    %133 = math.exp %132 : vector<8x128xf32>
    %134 = arith.mulf %129, %133 : vector<8x128xf32>
    %cst_60 = arith.constant 1.000000e+00 : f32
    %135 = vector.broadcast %cst_60 : f32 to vector<8x128xf32>
    %136 = arith.subf %135, %134 : vector<8x128xf32>
    %cst_61 = arith.constant 0.000000e+00 : f32
    %137 = vector.broadcast %cst_61 : f32 to vector<8x128xf32>
    %138 = arith.cmpf oge, %108, %137 : vector<8x128xf32>
    %cst_62 = arith.constant 0.000000e+00 : f32
    %139 = vector.broadcast %cst_62 : f32 to vector<8x128xf32>
    %140 = arith.subf %139, %136 : vector<8x128xf32>
    %141 = arith.select %138, %136, %140 : vector<8x128xi1>, vector<8x128xf32>
    %cst_63 = arith.constant 1.000000e+00 : f32
    %142 = vector.broadcast %cst_63 : f32 to vector<8x128xf32>
    %143 = arith.addf %142, %141 : vector<8x128xf32>
    %144 = arith.mulf %106, %143 : vector<8x128xf32>
    %145 = arith.truncf %144 : vector<8x128xf32> to vector<8x128xbf16>
    %c0_64 = arith.constant 0 : index
    %c0_65 = arith.constant 0 : index
    %146 = vector.load %arg5[%c0_64, %c0_65] : memref<128x128xbf16, #tpu.memory_space<vmem>>, vector<128x128xbf16>
    %cst_66 = arith.constant dense<0.000000e+00> : vector<8x128xf32>
    %147 = tpu.matmul %145, %146, %cst_66 {dimension_numbers = #tpu.dot_dimension_numbers<[1], [0], [0], [1], [0, 0, 1, 1], [], []>} : vector<8x128xbf16>, vector<128x128xbf16>, vector<8x128xf32> -> vector<8x128xf32>
    %148 = vector.broadcast %8 : vector<1x128xf32> to vector<8x128xf32>
    %149 = arith.addf %147, %148 : vector<8x128xf32>
    %150 = arith.addf %149, %77 : vector<8x128xf32>
    %c0_67 = arith.constant 0 : index
    %c0_68 = arith.constant 0 : index
    %151 = vector.load %arg8[%c0_67, %c0_68] : memref<8x128xf32, #tpu.memory_space<vmem>>, vector<8x128xf32>
    tpu.vector_store %arg8[%c0_67, %c0_68], %150 {strides = array<i32>} : memref<8x128xf32, #tpu.memory_space<vmem>>, vector<8x128xf32>,
    return
  }
  func.func @transform_0(%arg0: i32) -> (i32, i32) {
    %c0_i32 = arith.constant 0 : i32
    %c0_i32_0 = arith.constant 0 : i32
    return %arg0, %c0_i32 : i32, i32
  }
  func.func @transform_1(%arg0: i32) -> (i32, i32, i32, i32) {
    %c0_i32 = arith.constant 0 : i32
    %c0_i32_0 = arith.constant 0 : i32
    %c0_i32_1 = arith.constant 0 : i32
    %c0_i32_2 = arith.constant 0 : i32
    %c0_i32_3 = arith.constant 0 : i32
    return %c0_i32, %c0_i32_0, %c0_i32_1, %c0_i32_2 : i32, i32, i32, i32
  }
  func.func @transform_2(%arg0: i32) -> (i32, i32, i32) {
    %c0_i32 = arith.constant 0 : i32
    %c0_i32_0 = arith.constant 0 : i32
    %c0_i32_1 = arith.constant 0 : i32
    %c0_i32_2 = arith.constant 0 : i32
    return %c0_i32, %c0_i32_0, %c0_i32_1 : i32, i32, i32
  }
  func.func @transform_3(%arg0: i32) -> (i32, i32) {
    %c0_i32 = arith.constant 0 : i32
    %c0_i32_0 = arith.constant 0 : i32
    %c0_i32_1 = arith.constant 0 : i32
    return %c0_i32, %c0_i32_0 : i32, i32
  }
  func.func @transform_4(%arg0: i32) -> (i32, i32) {
    %c0_i32 = arith.constant 0 : i32
    %c0_i32_0 = arith.constant 0 : i32
    %c0_i32_1 = arith.constant 0 : i32
    return %c0_i32, %c0_i32_0 : i32, i32
  }
  func.func @transform_5(%arg0: i32) -> (i32, i32, i32, i32) {
    %c0_i32 = arith.constant 0 : i32
    %c0_i32_0 = arith.constant 0 : i32
    %c0_i32_1 = arith.constant 0 : i32
    %c0_i32_2 = arith.constant 0 : i32
    %c0_i32_3 = arith.constant 0 : i32
    return %c0_i32, %c0_i32_0, %c0_i32_1, %c0_i32_2 : i32, i32, i32, i32
  }
  func.func @transform_6(%arg0: i32) -> (i32, i32) {
    %c0_i32 = arith.constant 0 : i32
    %c0_i32_0 = arith.constant 0 : i32
    %c0_i32_1 = arith.constant 0 : i32
    return %c0_i32, %c0_i32_0 : i32, i32
  }
  func.func @transform_7(%arg0: i32) -> (i32, i32) {
    %c0_i32 = arith.constant 0 : i32
    %c0_i32_0 = arith.constant 0 : i32
    return %arg0, %c0_i32 : i32, i32
  }
}

</mosaic_0001>

<llo_original>
// kernel: transformer_encoder_block.1
$region0: #{transformer_encoder_block.1}
  #allocation0 [shape = 'u32[]', space=smem, size = 0x4, offset = 0x4, fixed_abs, tag = 'smem constant byte address 0x4 - core index']
  #allocation1 [shape = 'u32[144,128]{1,0:T(1,128)}', space=vmem, size = 0x12000, scoped, tag = 'internal scratch']
  %s0 = inlined_call_operand.vmem [shape: f32[16,128], index: 0, kind: input, shape index: {}]
  %s1 = inlined_call_operand.vmem [shape: bf16[3,4,128,8], index: 1, kind: input, shape index: {}]
  %s2 = inlined_call_operand.vmem [shape: bf16[4,8,128], index: 2, kind: input, shape index: {}]
  %s3 = inlined_call_operand.vmem [shape: bf16[128,128], index: 3, kind: input, shape index: {}]
  %s4 = inlined_call_operand.vmem [shape: bf16[128,128], index: 4, kind: input, shape index: {}]
  %s5 = inlined_call_operand.vmem [shape: f32[3,4,1,8], index: 5, kind: input, shape index: {}]
  %s6 = inlined_call_operand.vmem [shape: f32[7,128], index: 6, kind: input, shape index: {}]
  %s7 = inlined_call_operand.vmem [shape: f32[16,128], index: 7, kind: output, shape index: {}]
  %s8 = sld [smem:[#allocation0]]
  $region61: #{transformer_encoder_block.1} parent=0
    _
  %s10 = ssub.s32 1, %s8
  %s11 = scalar_select 0, %s10, %s8
  loop: start=0, step=1, limit=4
  $region2: #{transformer_encoder_block.1} parent=0 // loop_pre_header
    _
  $region3: #{transformer_encoder_block.1} parent=0 // loop_header
    %s13 = sphi 0, %s17
    %p14 = scmp.ge.s32.totalorder %s13, 4
    %s23 = sphi 0, %s25
    %s26 = sphi 0, %s23
    %s27 = sphi 0, %s26
    %s43 = sphi 0, %s27
    %s47 = sphi 0, %s47
    %s49 = sphi 0, %s47
    %s50 = sphi 0, %s49
    %s64 = sphi 0, %s50
    %s68 = sphi 0, %s68
    %s70 = sphi 0, %s68
    %s71 = sphi 0, %s70
    %s85 = sphi 0, %s71
    %s89 = sphi 0, %s89
    %s91 = sphi 0, %s89
    %s92 = sphi 0, %s91
    %s106 = sphi 0, %s92
    %s110 = sphi 0, %s110
    %s112 = sphi 0, %s110
    %s113 = sphi 0, %s112
    %s127 = sphi 0, %s113
    %s131 = sphi 0, %s131
    %s133 = sphi 0, %s131
    %s134 = sphi 0, %s133
    %s148 = sphi 0, %s134
    %s152 = sphi 0, %s152
    %s154 = sphi 0, %s152
    %s155 = sphi 0, %s154
    %s169 = sphi 0, %s155
    %s175 = sphi 0, %s177
    %s178 = sphi 0, %s175
    %s179 = sphi 0, %s178
    %s195 = sphi 0, %s179
  $region4: #{transformer_encoder_block.1} parent=0 // loop_header_branch
    %16 = sbr.rel (%p14) target = $region8
  $region5: #{transformer_encoder_block.1} parent=0 // loop_body
    %s18 = ssub.s32 %s13, 1
    %s19 = ssub.s32 %s13, 2
    %s20 = sadd.s32 %s13, 1
    %s21 = ssub.s32 %s13, %s20
    %p22 = scmp.eq.s32.totalorder %s21, 0
    %s24 = sadd.s32 %s23, 1
    %s25 = scalar_select %p22, %s23, %s24
    %p28 = pneg %p22
    %p29 = scmp.eq.s32.totalorder %s13, 1
    %p30 = por %p28, %p29
    %p31 = scmp.ne.s32.totalorder %s23, %s26
    %p32 = scmp.eq.s32.totalorder %s13, 0
    %p33 = por %p31, %p32
    %p34 = scmp.ne.s32.totalorder %s23, %s26
    %p35 = scmp.eq.s32.totalorder %s18, 1
    %p36 = por %p34, %p35
    %p37 = scmp.ne.s32.totalorder %s26, %s27
    %p38 = scmp.eq.s32.totalorder %s18, 0
    %p39 = por %p37, %p38
    %p40 = scmp.ne.s32.totalorder %s26, %s27
    %p41 = scmp.eq.s32.totalorder %s19, 1
    %p42 = por %p40, %p41
    %p44 = scmp.ne.s32.totalorder %s27, %s43
    %p45 = scmp.eq.s32.totalorder %s19, 0
    %p46 = por %p44, %p45
    %s48 = sadd.s32 %s47, 1
    %p51 = scmp.eq.s32.totalorder %s13, 1
    %p52 = scmp.ne.s32.totalorder %s47, %s49
    %p53 = scmp.eq.s32.totalorder %s13, 0
    %p54 = por %p52, %p53
    %p55 = scmp.ne.s32.totalorder %s47, %s49
    %p56 = scmp.eq.s32.totalorder %s18, 1
    %p57 = por %p55, %p56
    %p58 = scmp.ne.s32.totalorder %s49, %s50
    %p59 = scmp.eq.s32.totalorder %s18, 0
    %p60 = por %p58, %p59
    %p61 = scmp.ne.s32.totalorder %s49, %s50
    %p62 = scmp.eq.s32.totalorder %s19, 1
    %p63 = por %p61, %p62
    %p65 = scmp.ne.s32.totalorder %s50, %s64
    %p66 = scmp.eq.s32.totalorder %s19, 0
    %p67 = por %p65, %p66
    %s69 = sadd.s32 %s68, 1
    %p72 = scmp.eq.s32.totalorder %s13, 1
    %p73 = scmp.ne.s32.totalorder %s68, %s70
    %p74 = scmp.eq.s32.totalorder %s13, 0
    %p75 = por %p73, %p74
    %p76 = scmp.ne.s32.totalorder %s68, %s70
    %p77 = scmp.eq.s32.totalorder %s18, 1
    %p78 = por %p76, %p77
    %p79 = scmp.ne.s32.totalorder %s70, %s71
    %p80 = scmp.eq.s32.totalorder %s18, 0
    %p81 = por %p79, %p80
    %p82 = scmp.ne.s32.totalorder %s70, %s71
    %p83 = scmp.eq.s32.totalorder %s19, 1
    %p84 = por %p82, %p83
    %p86 = scmp.ne.s32.totalorder %s71, %s85
    %p87 = scmp.eq.s32.totalorder %s19, 0
    %p88 = por %p86, %p87
    %s90 = sadd.s32 %s89, 1
    %p93 = scmp.eq.s32.totalorder %s13, 1
    %p94 = scmp.ne.s32.totalorder %s89, %s91
    %p95 = scmp.eq.s32.totalorder %s13, 0
    %p96 = por %p94, %p95
    %p97 = scmp.ne.s32.totalorder %s89, %s91
    %p98 = scmp.eq.s32.totalorder %s18, 1
    %p99 = por %p97, %p98
    %p100 = scmp.ne.s32.totalorder %s91, %s92
    %p101 = scmp.eq.s32.totalorder %s18, 0
    %p102 = por %p100, %p101
    %p103 = scmp.ne.s32.totalorder %s91, %s92
    %p104 = scmp.eq.s32.totalorder %s19, 1
    %p105 = por %p103, %p104
    %p107 = scmp.ne.s32.totalorder %s92, %s106
    %p108 = scmp.eq.s32.totalorder %s19, 0
    %p109 = por %p107, %p108
    %s111 = sadd.s32 %s110, 1
    %p114 = scmp.eq.s32.totalorder %s13, 1
    %p115 = scmp.ne.s32.totalorder %s110, %s112
    %p116 = scmp.eq.s32.totalorder %s13, 0
    %p117 = por %p115, %p116
    %p118 = scmp.ne.s32.totalorder %s110, %s112
    %p119 = scmp.eq.s32.totalorder %s18, 1
    %p120 = por %p118, %p119
    %p121 = scmp.ne.s32.totalorder %s112, %s113
    %p122 = scmp.eq.s32.totalorder %s18, 0
    %p123 = por %p121, %p122
    %p124 = scmp.ne.s32.totalorder %s112, %s113
    %p125 = scmp.eq.s32.totalorder %s19, 1
    %p126 = por %p124, %p125
    %p128 = scmp.ne.s32.totalorder %s113, %s127
    %p129 = scmp.eq.s32.totalorder %s19, 0
    %p130 = por %p128, %p129
    %s132 = sadd.s32 %s131, 1
    %p135 = scmp.eq.s32.totalorder %s13, 1
    %p136 = scmp.ne.s32.totalorder %s131, %s133
    %p137 = scmp.eq.s32.totalorder %s13, 0
    %p138 = por %p136, %p137
    %p139 = scmp.ne.s32.totalorder %s131, %s133
    %p140 = scmp.eq.s32.totalorder %s18, 1
    %p141 = por %p139, %p140
    %p142 = scmp.ne.s32.totalorder %s133, %s134
    %p143 = scmp.eq.s32.totalorder %s18, 0
    %p144 = por %p142, %p143
    %p145 = scmp.ne.s32.totalorder %s133, %s134
    %p146 = scmp.eq.s32.totalorder %s19, 1
    %p147 = por %p145, %p146
    %p149 = scmp.ne.s32.totalorder %s134, %s148
    %p150 = scmp.eq.s32.totalorder %s19, 0
    %p151 = por %p149, %p150
    %s153 = sadd.s32 %s152, 1
    %p156 = scmp.eq.s32.totalorder %s13, 1
    %p157 = scmp.ne.s32.totalorder %s152, %s154
    %p158 = scmp.eq.s32.totalorder %s13, 0
    %p159 = por %p157, %p158
    %p160 = scmp.ne.s32.totalorder %s152, %s154
    %p161 = scmp.eq.s32.totalorder %s18, 1
    %p162 = por %p160, %p161
    %p163 = scmp.ne.s32.totalorder %s154, %s155
    %p164 = scmp.eq.s32.totalorder %s18, 0
    %p165 = por %p163, %p164
    %p166 = scmp.ne.s32.totalorder %s154, %s155
    %p167 = scmp.eq.s32.totalorder %s19, 1
    %p168 = por %p166, %p167
    %p170 = scmp.ne.s32.totalorder %s155, %s169
    %p171 = scmp.eq.s32.totalorder %s19, 0
    %p172 = por %p170, %p171
    %s173 = ssub.s32 %s13, %s20
    %p174 = scmp.eq.s32.totalorder %s173, 0
    %s176 = sadd.s32 %s175, 1
    %s177 = scalar_select %p174, %s175, %s176
    %p180 = pneg %p174
    %p181 = scmp.eq.s32.totalorder %s13, 1
    %p182 = por %p180, %p181
    %p183 = scmp.ne.s32.totalorder %s175, %s178
    %p184 = scmp.eq.s32.totalorder %s13, 0
    %p185 = por %p183, %p184
    %p186 = scmp.ne.s32.totalorder %s175, %s178
    %p187 = scmp.eq.s32.totalorder %s18, 1
    %p188 = por %p186, %p187
    %p189 = scmp.ne.s32.totalorder %s178, %s179
    %p190 = scmp.eq.s32.totalorder %s18, 0
    %p191 = por %p189, %p190
    %p192 = scmp.ne.s32.totalorder %s178, %s179
    %p193 = scmp.eq.s32.totalorder %s19, 1
    %p194 = por %p192, %p193
    %p196 = scmp.ne.s32.totalorder %s179, %s195
    %p197 = scmp.eq.s32.totalorder %s19, 0
    %p198 = por %p196, %p197
    %p199 = scmp.le.s32.totalorder 1, %s13
    %p200 = scmp.lt.s32.totalorder %s13, 3
    %p201 = pnand %p199, %p200
    %p202 = pneg %p201
    // Predicated region
    $region9: #{transformer_encoder_block.1} parent=5 // pred_check
      _
    $region10: #{transformer_encoder_block.1} parent=5 // pred_check_branch
      %204 = sbr.rel (%p201) target = $region12
    $region11: #{transformer_encoder_block.1} parent=5 // pred_region
      %s205 = ssub.s32 %s13, 1
      // Predicated region
      $region13: #{transformer_encoder_block.1} parent=11 // pred_check
        %p206 = pneg %p60
      $region14: #{transformer_encoder_block.1} parent=11 // pred_check_branch
        %208 = sbr.rel (%p206) target = $region16
      $region15: #{transformer_encoder_block.1} parent=11 // pred_region
        _
      $region16: #{transformer_encoder_block.1} parent=11 // pred_fallthru
        _
      // Predicated region
      $region17: #{transformer_encoder_block.1} parent=11 // pred_check
        %p209 = pneg %p81
      $region18: #{transformer_encoder_block.1} parent=11 // pred_check_branch
        %211 = sbr.rel (%p209) target = $region20
      $region19: #{transformer_encoder_block.1} parent=11 // pred_region
        _
      $region20: #{transformer_encoder_block.1} parent=11 // pred_fallthru
        _
      // Predicated region
      $region21: #{transformer_encoder_block.1} parent=11 // pred_check
        %p212 = pneg %p102
      $region22: #{transformer_encoder_block.1} parent=11 // pred_check_branch
        %214 = sbr.rel (%p212) target = $region24
      $region23: #{transformer_encoder_block.1} parent=11 // pred_region
        _
      $region24: #{transformer_encoder_block.1} parent=11 // pred_fallthru
        _
      // Predicated region
      $region25: #{transformer_encoder_block.1} parent=11 // pred_check
        %p215 = pneg %p123
      $region26: #{transformer_encoder_block.1} parent=11 // pred_check_branch
        %217 = sbr.rel (%p215) target = $region28
      $region27: #{transformer_encoder_block.1} parent=11 // pred_region
        _
      $region28: #{transformer_encoder_block.1} parent=11 // pred_fallthru
        _
      // Predicated region
      $region29: #{transformer_encoder_block.1} parent=11 // pred_check
        %p218 = pneg %p144
      $region30: #{transformer_encoder_block.1} parent=11 // pred_check_branch
        %220 = sbr.rel (%p218) target = $region32
      $region31: #{transformer_encoder_block.1} parent=11 // pred_region
        _
      $region32: #{transformer_encoder_block.1} parent=11 // pred_fallthru
        _
      // Predicated region
      $region33: #{transformer_encoder_block.1} parent=11 // pred_check
        %p221 = pneg %p165
      $region34: #{transformer_encoder_block.1} parent=11 // pred_check_branch
        %223 = sbr.rel (%p221) target = $region36
      $region35: #{transformer_encoder_block.1} parent=11 // pred_region
        _
      $region36: #{transformer_encoder_block.1} parent=11 // pred_fallthru
        _
    $region12: #{transformer_encoder_block.1} parent=5 // pred_fallthru
      _
    %p224 = scmp.lt.s32.totalorder %s13, 2
    // Predicated region
    $region37: #{transformer_encoder_block.1} parent=5 // pred_check
      %p225 = pneg %p224
    $region38: #{transformer_encoder_block.1} parent=5 // pred_check_branch
      %227 = sbr.rel (%p225) target = $region40
    $region39: #{transformer_encoder_block.1} parent=5 // pred_region
      // Predicated region
      $region41: #{transformer_encoder_block.1} parent=39 // pred_check
        %p228 = pneg %p33
      $region42: #{transformer_encoder_block.1} parent=39 // pred_check_branch
        %230 = sbr.rel (%p228) target = $region44
      $region43: #{transformer_encoder_block.1} parent=39 // pred_region
        %p231 = scmp.lt.s32.totalorder %s13, 1
        %s232 = scalar_select %p231, %s13, 1
        %s233 = smul.addr %s232, 8
        %s234 = scalar_lea.vmem %s0, %s233
      $region44: #{transformer_encoder_block.1} parent=39 // pred_fallthru
        _
    $region40: #{transformer_encoder_block.1} parent=5 // pred_fallthru
      _
    %p235 = scmp.le.s32.totalorder 1, %s13
    %p236 = scmp.lt.s32.totalorder %s13, 3
    %p237 = pnand %p235, %p236
    %p238 = pneg %p237
    // Predicated region
    $region45: #{transformer_encoder_block.1} parent=5 // pred_check
      _
    $region46: #{transformer_encoder_block.1} parent=5 // pred_check_branch
      %240 = sbr.rel (%p237) target = $region48
    $region47: #{transformer_encoder_block.1} parent=5 // pred_region
      %s241 = ssub.s32 %s13, 1
      %p242 = scmp.lt.s32.totalorder %s18, 1
      %s243 = scalar_select %p242, %s18, 1
      %s244 = smul.addr %s243, 8
      %s245 = scalar_lea.vmem %s0, %s244
      %p246 = pneg %p39
      %p247 = pneg %p36
      %p248 = pneg %p60
      %p249 = pneg %p57
      %p250 = pneg %p81
      %p251 = pneg %p78
      %p252 = pneg %p102
      %p253 = pneg %p99
      %p254 = pneg %p123
      %p255 = pneg %p120
      %p256 = pneg %p144
      %p257 = pneg %p141
      %p258 = pneg %p165
      %p259 = pneg %p162
      %p260 = pneg %p191
      %p261 = pneg %p188
      %p262 = scmp.lt.s32.totalorder %s18, 1
      %s263 = scalar_select %p262, %s18, 1
      %s264 = smul.addr %s263, 8
      %s265 = scalar_lea.vmem %s7, %s264
      %p266 = scmp.lt.s32.totalorder %s18, 1
      %s267 = scalar_select %p266, %s18, 1
      %s268 = smul.addr %s267, 8
      %s269 = scalar_lea.vmem %s0, %s268
      %p270 = scmp.lt.s32.totalorder %s18, 1
      %s271 = scalar_select %p270, %s18, 1
      %s272 = smul.addr %s271, 8
      %s273 = scalar_lea.vmem %s7, %s272
      %v275 = vld [vmem:[%s269] sm:$0xff]
      %v276 = vld [vmem:[%s6] sm:$0x7f]
      %277 = vadd.xlane.f32.xlu0 %v275
      %v278 = vpop.xlane.xlu0 %277
      %v279 = vmul.f32 %v278, 0.03125
      %v280 = vmul.f32 %v275, %v275
      %281 = vadd.xlane.f32.xlu0 %v280
      %v282 = vpop.xlane.xlu0 %281
      %v283 = vmul.f32 %v282, 0.03125
      %v284 = vmul.f32 %v279, %v279
      %v285 = vsub.f32 %v283, %v284
      %v286 = vsub.f32 %v275, %v279
      %v287 = vadd.f32 %v285, 1e-06
      %v288 = vrsqrt.pop %v287
      %v289 = vmul.f32 %v286, %v288
      %v290 = vlaneseq
      %v291 = vshrl.u32 %v290, 7
      %v292 = vsub.s32 0, %v291
      %v293 = vrot.slane %v276, %v292
      %v294 = vmul.f32 %v289, %v293
      %v295 = vlaneseq
      %v296 = vshrl.u32 %v295, 7
      %v297 = vsub.s32 1, %v296
      %v298 = vrot.slane %v276, %v297
      %v299 = vadd.f32 %v294, %v298
      %v300 = vpack.c.bf16 %v299, %v299
      %v301 = vld [vmem:[%s1] sm:$0xf]
      %v302 = vld [vmem:[%s1 + $0x4] sm:$0xf]
      %v303 = vld [vmem:[%s1 + $0x8] sm:$0xf]
      %v304 = vld [vmem:[%s1 + $0xc] sm:$0xf]
      %v305 = vld [vmem:[%s1 + $0x10] sm:$0xf]
      %v306 = vld [vmem:[%s1 + $0x14] sm:$0xf]
      %v307 = vld [vmem:[%s1 + $0x18] sm:$0xf]
      %v308 = vld [vmem:[%s1 + $0x1c] sm:$0xf]
      %v309 = vld [vmem:[%s1 + $0x20] sm:$0xf]
      %v310 = vld [vmem:[%s1 + $0x24] sm:$0xf]
      %v311 = vld [vmem:[%s1 + $0x28] sm:$0xf]
      %v312 = vld [vmem:[%s1 + $0x2c] sm:$0xf]
      %v313 = vld [vmem:[%s1 + $0x30] sm:$0xf]
      %v314 = vld [vmem:[%s1 + $0x34] sm:$0xf]
      %v315 = vld [vmem:[%s1 + $0x38] sm:$0xf]
      %v316 = vld [vmem:[%s1 + $0x3c] sm:$0xf]
      %v317 = vld [vmem:[%s1 + $0x40] sm:$0xf]
      %v318 = vld [vmem:[%s1 + $0x44] sm:$0xf]
      %v319 = vld [vmem:[%s1 + $0x48] sm:$0xf]
      %v320 = vld [vmem:[%s1 + $0x4c] sm:$0xf]
      %v321 = vld [vmem:[%s1 + $0x50] sm:$0xf]
      %v322 = vld [vmem:[%s1 + $0x54] sm:$0xf]
      %v323 = vld [vmem:[%s1 + $0x58] sm:$0xf]
      %v324 = vld [vmem:[%s1 + $0x5c] sm:$0xf]
      %v325 = vld [vmem:[%s1 + $0x60] sm:$0xf]
      %v326 = vld [vmem:[%s1 + $0x64] sm:$0xf]
      %v327 = vld [vmem:[%s1 + $0x68] sm:$0xf]
      %v328 = vld [vmem:[%s1 + $0x6c] sm:$0xf]
      %v329 = vld [vmem:[%s1 + $0x70] sm:$0xf]
      %v330 = vld [vmem:[%s1 + $0x74] sm:$0xf]
      %v331 = vld [vmem:[%s1 + $0x78] sm:$0xf]
      %v332 = vld [vmem:[%s1 + $0x7c] sm:$0xf]
      %v333 = vld [vmem:[%s1 + $0x80] sm:$0xf]
      %v334 = vld [vmem:[%s1 + $0x84] sm:$0xf]
      %v335 = vld [vmem:[%s1 + $0x88] sm:$0xf]
      %v336 = vld [vmem:[%s1 + $0x8c] sm:$0xf]
      %v337 = vld [vmem:[%s1 + $0x90] sm:$0xf]
      %v338 = vld [vmem:[%s1 + $0x94] sm:$0xf]
      %v339 = vld [vmem:[%s1 + $0x98] sm:$0xf]
      %v340 = vld [vmem:[%s1 + $0x9c] sm:$0xf]
      %v341 = vld [vmem:[%s1 + $0xa0] sm:$0xf]
      %v342 = vld [vmem:[%s1 + $0xa4] sm:$0xf]
      %v343 = vld [vmem:[%s1 + $0xa8] sm:$0xf]
      %v344 = vld [vmem:[%s1 + $0xac] sm:$0xf]
      %v345 = vld [vmem:[%s1 + $0xb0] sm:$0xf]
      %v346 = vld [vmem:[%s1 + $0xb4] sm:$0xf]
      %v347 = vld [vmem:[%s1 + $0xb8] sm:$0xf]
      %v348 = vld [vmem:[%s1 + $0xbc] sm:$0xf]
      %v349 = vld [vmem:[%s1 + $0xc0] sm:$0xf]
      %v350 = vld [vmem:[%s1 + $0xc4] sm:$0xf]
      %v351 = vld [vmem:[%s1 + $0xc8] sm:$0xf]
      %v352 = vld [vmem:[%s1 + $0xcc] sm:$0xf]
      %v353 = vld [vmem:[%s1 + $0xd0] sm:$0xf]
      %v354 = vld [vmem:[%s1 + $0xd4] sm:$0xf]
      %v355 = vld [vmem:[%s1 + $0xd8] sm:$0xf]
      %v356 = vld [vmem:[%s1 + $0xdc] sm:$0xf]
      %v357 = vld [vmem:[%s1 + $0xe0] sm:$0xf]
      %v358 = vld [vmem:[%s1 + $0xe4] sm:$0xf]
      %v359 = vld [vmem:[%s1 + $0xe8] sm:$0xf]
      %v360 = vld [vmem:[%s1 + $0xec] sm:$0xf]
      %v361 = vld [vmem:[%s1 + $0xf0] sm:$0xf]
      %v362 = vld [vmem:[%s1 + $0xf4] sm:$0xf]
      %v363 = vld [vmem:[%s1 + $0xf8] sm:$0xf]
      %v364 = vld [vmem:[%s1 + $0xfc] sm:$0xf]
      %v365 = vld [vmem:[%s5] sm:$0x1]
      %v366 = vld [vmem:[%s5 + $0x1] sm:$0x1]
      %v367 = vld [vmem:[%s5 + $0x2] sm:$0x1]
      %v368 = vld [vmem:[%s5 + $0x3] sm:$0x1]
      %v373 = vlaneseq
      %v374 = vshrl.u32 %v373, 7
      %v375 = vsub.s32 0, %v374
      %v376 = vrot.slane %v365, %v375
      %v377 = vlaneseq
      %v378 = vshrl.u32 %v377, 7
      %v379 = vsub.s32 0, %v378
      %v380 = vrot.slane %v366, %v379
      %v381 = vlaneseq
      %v382 = vshrl.u32 %v381, 7
      %v383 = vsub.s32 0, %v382
      %v384 = vrot.slane %v367, %v383
      %v385 = vlaneseq
      %v386 = vshrl.u32 %v385, 7
      %v387 = vsub.s32 0, %v386
      %v388 = vrot.slane %v368, %v387
      %v409 = vunpack.c.l.b16 %v301
      %v410 = vunpack.c.l.b16 %v302
      %v411 = vunpack.c.l.b16 %v303
      %v412 = vunpack.c.l.b16 %v304
      %v413 = vunpack.c.l.b16 %v305
      %v414 = vunpack.c.l.b16 %v306
      %v415 = vunpack.c.l.b16 %v307
      %v416 = vunpack.c.l.b16 %v308
      %v417 = vunpack.c.l.b16 %v309
      %v418 = vunpack.c.l.b16 %v310
      %v419 = vunpack.c.l.b16 %v311
      %v420 = vunpack.c.l.b16 %v312
      %v421 = vunpack.c.l.b16 %v313
      %v422 = vunpack.c.l.b16 %v314
      %v423 = vunpack.c.l.b16 %v315
      %v424 = vunpack.c.l.b16 %v316
      %v425 = vpack.c.b16 %v410, %v409
      %v426 = vpack.c.b16 %v412, %v411
      %v427 = vpack.c.b16 %v414, %v413
      %v428 = vpack.c.b16 %v416, %v415
      %v429 = vpack.c.b16 %v418, %v417
      %v430 = vpack.c.b16 %v420, %v419
      %v431 = vpack.c.b16 %v422, %v421
      %v432 = vpack.c.b16 %v424, %v423
      %441 = vmatprep.subr.bf16.mxu0 0
      %442 = vmatpush1.bf16.msra.mxu0 %v425
      %443 = vmatprep.subr.bf16.mxu0 0
      %444 = vmatpush1.bf16.msra.mxu0 %v426
      %445 = vmatprep.subr.bf16.mxu0 0
      %446 = vmatpush1.bf16.msra.mxu0 %v427
      %447 = vmatprep.subr.bf16.mxu0 0
      %448 = vmatpush1.bf16.msra.mxu0 %v428
      %449 = vmatprep.subr.bf16.mxu0 0
      %450 = vmatpush1.bf16.msra.mxu0 %v429
      %451 = vmatprep.subr.bf16.mxu0 0
      %452 = vmatpush1.bf16.msra.mxu0 %v430
      %453 = vmatprep.subr.bf16.mxu0 0
      %454 = vmatpush1.bf16.msra.mxu0 %v431
      %455 = vmatprep.subr.bf16.mxu0 0
      %456 = vmatpush1.bf16.msra.mxu0 %v432
      %457 = vmatprep.subr.bf16.mxu0 0
      %458 = vmatpush1.bf16.msra.mxu0 0
      %459 = vmatprep.subr.bf16.mxu0 0
      %460 = vmatpush1.bf16.msra.mxu0 0
      %461 = vmatprep.subr.bf16.mxu0 0
      %462 = vmatpush1.bf16.msra.mxu0 0
      %463 = vmatprep.subr.bf16.mxu0 0
      %464 = vmatpush1.bf16.msra.mxu0 0
      %465 = vmatprep.subr.bf16.mxu0 0
      %466 = vmatpush1.bf16.msra.mxu0 0
      %467 = vmatprep.subr.bf16.mxu0 0
      %468 = vmatpush1.bf16.msra.mxu0 0
      %469 = vmatprep.subr.bf16.mxu0 0
      %470 = vmatpush1.bf16.msra.mxu0 0
      %471 = vmatprep.subr.bf16.mxu0 0
      %472 = vmatpush1.bf16.msra.mxu0 0
      %473 = vmatprep.mubr.bf16.mxu0 0
      %474 = vmatmul.mubr.bf16.gmra.mrb[0].mxu0 %v300
      %v475 = vpop.f32.mrb[0].mxu0
      %v476 = vadd.f32 %v376, %v475
      %v477 = vpop.f32.mrb[0].mxu0
      %v478 = vpop.f32.mrb[0].mxu0
      %v479 = vpop.f32.mrb[0].mxu0
      %480 = vdwg.mxu0
      %v497 = vunpack.c.l.b16 %v317
      %v498 = vunpack.c.l.b16 %v318
      %v499 = vunpack.c.l.b16 %v319
      %v500 = vunpack.c.l.b16 %v320
      %v501 = vunpack.c.l.b16 %v321
      %v502 = vunpack.c.l.b16 %v322
      %v503 = vunpack.c.l.b16 %v323
      %v504 = vunpack.c.l.b16 %v324
      %v505 = vunpack.c.l.b16 %v325
      %v506 = vunpack.c.l.b16 %v326
      %v507 = vunpack.c.l.b16 %v327
      %v508 = vunpack.c.l.b16 %v328
      %v509 = vunpack.c.l.b16 %v329
      %v510 = vunpack.c.l.b16 %v330
      %v511 = vunpack.c.l.b16 %v331
      %v512 = vunpack.c.l.b16 %v332
      %v513 = vpack.c.b16 %v498, %v497
      %v514 = vpack.c.b16 %v500, %v499
      %v515 = vpack.c.b16 %v502, %v501
      %v516 = vpack.c.b16 %v504, %v503
      %v517 = vpack.c.b16 %v506, %v505
      %v518 = vpack.c.b16 %v508, %v507
      %v519 = vpack.c.b16 %v510, %v509
      %v520 = vpack.c.b16 %v512, %v511
      %529 = vmatprep.subr.bf16.mxu0 0
      %530 = vmatpush1.bf16.msra.mxu0 %v513
      %531 = vmatprep.subr.bf16.mxu0 0
      %532 = vmatpush1.bf16.msra.mxu0 %v514
      %533 = vmatprep.subr.bf16.mxu0 0
      %534 = vmatpush1.bf16.msra.mxu0 %v515
      %535 = vmatprep.subr.bf16.mxu0 0
      %536 = vmatpush1.bf16.msra.mxu0 %v516
      %537 = vmatprep.subr.bf16.mxu0 0
      %538 = vmatpush1.bf16.msra.mxu0 %v517
      %539 = vmatprep.subr.bf16.mxu0 0
      %540 = vmatpush1.bf16.msra.mxu0 %v518
      %541 = vmatprep.subr.bf16.mxu0 0
      %542 = vmatpush1.bf16.msra.mxu0 %v519
      %543 = vmatprep.subr.bf16.mxu0 0
      %544 = vmatpush1.bf16.msra.mxu0 %v520
      %545 = vmatprep.subr.bf16.mxu0 0
      %546 = vmatpush1.bf16.msra.mxu0 0
      %547 = vmatprep.subr.bf16.mxu0 0
      %548 = vmatpush1.bf16.msra.mxu0 0
      %549 = vmatprep.subr.bf16.mxu0 0
      %550 = vmatpush1.bf16.msra.mxu0 0
      %551 = vmatprep.subr.bf16.mxu0 0
      %552 = vmatpush1.bf16.msra.mxu0 0
      %553 = vmatprep.subr.bf16.mxu0 0
      %554 = vmatpush1.bf16.msra.mxu0 0
      %555 = vmatprep.subr.bf16.mxu0 0
      %556 = vmatpush1.bf16.msra.mxu0 0
      %557 = vmatprep.subr.bf16.mxu0 0
      %558 = vmatpush1.bf16.msra.mxu0 0
      %559 = vmatprep.subr.bf16.mxu0 0
      %560 = vmatpush1.bf16.msra.mxu0 0
      %561 = vmatprep.mubr.bf16.mxu0 0
      %562 = vmatmul.mubr.bf16.gmra.mrb[0].mxu0 %v300
      %v563 = vpop.f32.mrb[0].mxu0
      %v564 = vadd.f32 %v380, %v563
      %v565 = vpop.f32.mrb[0].mxu0
      %v566 = vpop.f32.mrb[0].mxu0
      %v567 = vpop.f32.mrb[0].mxu0
      %568 = vdwg.mxu0
      %v585 = vunpack.c.l.b16 %v333
      %v586 = vunpack.c.l.b16 %v334
      %v587 = vunpack.c.l.b16 %v335
      %v588 = vunpack.c.l.b16 %v336
      %v589 = vunpack.c.l.b16 %v337
      %v590 = vunpack.c.l.b16 %v338
      %v591 = vunpack.c.l.b16 %v339
      %v592 = vunpack.c.l.b16 %v340
      %v593 = vunpack.c.l.b16 %v341
      %v594 = vunpack.c.l.b16 %v342
      %v595 = vunpack.c.l.b16 %v343
      %v596 = vunpack.c.l.b16 %v344
      %v597 = vunpack.c.l.b16 %v345
      %v598 = vunpack.c.l.b16 %v346
      %v599 = vunpack.c.l.b16 %v347
      %v600 = vunpack.c.l.b16 %v348
      %v601 = vpack.c.b16 %v586, %v585
      %v602 = vpack.c.b16 %v588, %v587
      %v603 = vpack.c.b16 %v590, %v589
      %v604 = vpack.c.b16 %v592, %v591
      %v605 = vpack.c.b16 %v594, %v593
      %v606 = vpack.c.b16 %v596, %v595
      %v607 = vpack.c.b16 %v598, %v597
      %v608 = vpack.c.b16 %v600, %v599
      %617 = vmatprep.subr.bf16.mxu0 0
      %618 = vmatpush1.bf16.msra.mxu0 %v601
      %619 = vmatprep.subr.bf16.mxu0 0
      %620 = vmatpush1.bf16.msra.mxu0 %v602
      %621 = vmatprep.subr.bf16.mxu0 0
      %622 = vmatpush1.bf16.msra.mxu0 %v603
      %623 = vmatprep.subr.bf16.mxu0 0
      %624 = vmatpush1.bf16.msra.mxu0 %v604
      %625 = vmatprep.subr.bf16.mxu0 0
      %626 = vmatpush1.bf16.msra.mxu0 %v605
      %627 = vmatprep.subr.bf16.mxu0 0
      %628 = vmatpush1.bf16.msra.mxu0 %v606
      %629 = vmatprep.subr.bf16.mxu0 0
      %630 = vmatpush1.bf16.msra.mxu0 %v607
      %631 = vmatprep.subr.bf16.mxu0 0
      %632 = vmatpush1.bf16.msra.mxu0 %v608
      %633 = vmatprep.subr.bf16.mxu0 0
      %634 = vmatpush1.bf16.msra.mxu0 0
      %635 = vmatprep.subr.bf16.mxu0 0
      %636 = vmatpush1.bf16.msra.mxu0 0
      %637 = vmatprep.subr.bf16.mxu0 0
      %638 = vmatpush1.bf16.msra.mxu0 0
      %639 = vmatprep.subr.bf16.mxu0 0
      %640 = vmatpush1.bf16.msra.mxu0 0
      %641 = vmatprep.subr.bf16.mxu0 0
      %642 = vmatpush1.bf16.msra.mxu0 0
      %643 = vmatprep.subr.bf16.mxu0 0
      %644 = vmatpush1.bf16.msra.mxu0 0
      %645 = vmatprep.subr.bf16.mxu0 0
      %646 = vmatpush1.bf16.msra.mxu0 0
      %647 = vmatprep.subr.bf16.mxu0 0
      %648 = vmatpush1.bf16.msra.mxu0 0
      %649 = vmatprep.mubr.bf16.mxu0 0
      %650 = vmatmul.mubr.bf16.gmra.mrb[0].mxu0 %v300
      %v651 = vpop.f32.mrb[0].mxu0
      %v652 = vadd.f32 %v384, %v651
      %v653 = vpop.f32.mrb[0].mxu0
      %v654 = vpop.f32.mrb[0].mxu0
      %v655 = vpop.f32.mrb[0].mxu0
      %656 = vdwg.mxu0
      %v673 = vunpack.c.l.b16 %v349
      %v674 = vunpack.c.l.b16 %v350
      %v675 = vunpack.c.l.b16 %v351
      %v676 = vunpack.c.l.b16 %v352
      %v677 = vunpack.c.l.b16 %v353
      %v678 = vunpack.c.l.b16 %v354
      %v679 = vunpack.c.l.b16 %v355
      %v680 = vunpack.c.l.b16 %v356
      %v681 = vunpack.c.l.b16 %v357
      %v682 = vunpack.c.l.b16 %v358
      %v683 = vunpack.c.l.b16 %v359
      %v684 = vunpack.c.l.b16 %v360
      %v685 = vunpack.c.l.b16 %v361
      %v686 = vunpack.c.l.b16 %v362
      %v687 = vunpack.c.l.b16 %v363
      %v688 = vunpack.c.l.b16 %v364
      %v689 = vpack.c.b16 %v674, %v673
      %v690 = vpack.c.b16 %v676, %v675
      %v691 = vpack.c.b16 %v678, %v677
      %v692 = vpack.c.b16 %v680, %v679
      %v693 = vpack.c.b16 %v682, %v681
      %v694 = vpack.c.b16 %v684, %v683
      %v695 = vpack.c.b16 %v686, %v685
      %v696 = vpack.c.b16 %v688, %v687
      %705 = vmatprep.subr.bf16.mxu0 0
      %706 = vmatpush1.bf16.msra.mxu0 %v689
      %707 = vmatprep.subr.bf16.mxu0 0
      %708 = vmatpush1.bf16.msra.mxu0 %v690
      %709 = vmatprep.subr.bf16.mxu0 0
      %710 = vmatpush1.bf16.msra.mxu0 %v691
      %711 = vmatprep.subr.bf16.mxu0 0
      %712 = vmatpush1.bf16.msra.mxu0 %v692
      %713 = vmatprep.subr.bf16.mxu0 0
      %714 = vmatpush1.bf16.msra.mxu0 %v693
      %715 = vmatprep.subr.bf16.mxu0 0
      %716 = vmatpush1.bf16.msra.mxu0 %v694
      %717 = vmatprep.subr.bf16.mxu0 0
      %718 = vmatpush1.bf16.msra.mxu0 %v695
      %719 = vmatprep.subr.bf16.mxu0 0
      %720 = vmatpush1.bf16.msra.mxu0 %v696
      %721 = vmatprep.subr.bf16.mxu0 0
      %722 = vmatpush1.bf16.msra.mxu0 0
      %723 = vmatprep.subr.bf16.mxu0 0
      %724 = vmatpush1.bf16.msra.mxu0 0
      %725 = vmatprep.subr.bf16.mxu0 0
      %726 = vmatpush1.bf16.msra.mxu0 0
      %727 = vmatprep.subr.bf16.mxu0 0
      %728 = vmatpush1.bf16.msra.mxu0 0
      %729 = vmatprep.subr.bf16.mxu0 0
      %730 = vmatpush1.bf16.msra.mxu0 0
      %731 = vmatprep.subr.bf16.mxu0 0
      %732 = vmatpush1.bf16.msra.mxu0 0
      %733 = vmatprep.subr.bf16.mxu0 0
      %734 = vmatpush1.bf16.msra.mxu0 0
      %735 = vmatprep.subr.bf16.mxu0 0
      %736 = vmatpush1.bf16.msra.mxu0 0
      %737 = vmatprep.mubr.bf16.mxu0 0
      %738 = vmatmul.mubr.bf16.gmra.mrb[0].mxu0 %v300
      %v739 = vpop.f32.mrb[0].mxu0
      %v740 = vadd.f32 %v388, %v739
      %v741 = vpop.f32.mrb[0].mxu0
      %v742 = vpop.f32.mrb[0].mxu0
      %v743 = vpop.f32.mrb[0].mxu0
      %744 = vdwg.mxu0
      %s745 = scalar_lea.vmem %s1, 256
      %v746 = vld [vmem:[%s745] sm:$0xf]
      %v747 = vld [vmem:[%s745 + $0x4] sm:$0xf]
      %v748 = vld [vmem:[%s745 + $0x8] sm:$0xf]
      %v749 = vld [vmem:[%s745 + $0xc] sm:$0xf]
      %v750 = vld [vmem:[%s745 + $0x10] sm:$0xf]
      %v751 = vld [vmem:[%s745 + $0x14] sm:$0xf]
      %v752 = vld [vmem:[%s745 + $0x18] sm:$0xf]
      %v753 = vld [vmem:[%s745 + $0x1c] sm:$0xf]
      %v754 = vld [vmem:[%s745 + $0x20] sm:$0xf]
      %v755 = vld [vmem:[%s745 + $0x24] sm:$0xf]
      %v756 = vld [vmem:[%s745 + $0x28] sm:$0xf]
      %v757 = vld [vmem:[%s745 + $0x2c] sm:$0xf]
      %v758 = vld [vmem:[%s745 + $0x30] sm:$0xf]
      %v759 = vld [vmem:[%s745 + $0x34] sm:$0xf]
      %v760 = vld [vmem:[%s745 + $0x38] sm:$0xf]
      %v761 = vld [vmem:[%s745 + $0x3c] sm:$0xf]
      %v762 = vld [vmem:[%s745 + $0x40] sm:$0xf]
      %v763 = vld [vmem:[%s745 + $0x44] sm:$0xf]
      %v764 = vld [vmem:[%s745 + $0x48] sm:$0xf]
      %v765 = vld [vmem:[%s745 + $0x4c] sm:$0xf]
      %v766 = vld [vmem:[%s745 + $0x50] sm:$0xf]
      %v767 = vld [vmem:[%s745 + $0x54] sm:$0xf]
      %v768 = vld [vmem:[%s745 + $0x58] sm:$0xf]
      %v769 = vld [vmem:[%s745 + $0x5c] sm:$0xf]
      %v770 = vld [vmem:[%s745 + $0x60] sm:$0xf]
      %v771 = vld [vmem:[%s745 + $0x64] sm:$0xf]
      %v772 = vld [vmem:[%s745 + $0x68] sm:$0xf]
      %v773 = vld [vmem:[%s745 + $0x6c] sm:$0xf]
      %v774 = vld [vmem:[%s745 + $0x70] sm:$0xf]
      %v775 = vld [vmem:[%s745 + $0x74] sm:$0xf]
      %v776 = vld [vmem:[%s745 + $0x78] sm:$0xf]
      %v777 = vld [vmem:[%s745 + $0x7c] sm:$0xf]
      %v778 = vld [vmem:[%s745 + $0x80] sm:$0xf]
      %v779 = vld [vmem:[%s745 + $0x84] sm:$0xf]
      %v780 = vld [vmem:[%s745 + $0x88] sm:$0xf]
      %v781 = vld [vmem:[%s745 + $0x8c] sm:$0xf]
      %v782 = vld [vmem:[%s745 + $0x90] sm:$0xf]
      %v783 = vld [vmem:[%s745 + $0x94] sm:$0xf]
      %v784 = vld [vmem:[%s745 + $0x98] sm:$0xf]
      %v785 = vld [vmem:[%s745 + $0x9c] sm:$0xf]
      %v786 = vld [vmem:[%s745 + $0xa0] sm:$0xf]
      %v787 = vld [vmem:[%s745 + $0xa4] sm:$0xf]
      %v788 = vld [vmem:[%s745 + $0xa8] sm:$0xf]
      %v789 = vld [vmem:[%s745 + $0xac] sm:$0xf]
      %v790 = vld [vmem:[%s745 + $0xb0] sm:$0xf]
      %v791 = vld [vmem:[%s745 + $0xb4] sm:$0xf]
      %v792 = vld [vmem:[%s745 + $0xb8] sm:$0xf]
      %v793 = vld [vmem:[%s745 + $0xbc] sm:$0xf]
      %v794 = vld [vmem:[%s745 + $0xc0] sm:$0xf]
      %v795 = vld [vmem:[%s745 + $0xc4] sm:$0xf]
      %v796 = vld [vmem:[%s745 + $0xc8] sm:$0xf]
      %v797 = vld [vmem:[%s745 + $0xcc] sm:$0xf]
      %v798 = vld [vmem:[%s745 + $0xd0] sm:$0xf]
      %v799 = vld [vmem:[%s745 + $0xd4] sm:$0xf]
      %v800 = vld [vmem:[%s745 + $0xd8] sm:$0xf]
      %v801 = vld [vmem:[%s745 + $0xdc] sm:$0xf]
      %v802 = vld [vmem:[%s745 + $0xe0] sm:$0xf]
      %v803 = vld [vmem:[%s745 + $0xe4] sm:$0xf]
      %v804 = vld [vmem:[%s745 + $0xe8] sm:$0xf]
      %v805 = vld [vmem:[%s745 + $0xec] sm:$0xf]
      %v806 = vld [vmem:[%s745 + $0xf0] sm:$0xf]
      %v807 = vld [vmem:[%s745 + $0xf4] sm:$0xf]
      %v808 = vld [vmem:[%s745 + $0xf8] sm:$0xf]
      %v809 = vld [vmem:[%s745 + $0xfc] sm:$0xf]
      %s810 = scalar_lea.vmem %s5, 4
      %v811 = vld [vmem:[%s810] sm:$0x1]
      %v812 = vld [vmem:[%s810 + $0x1] sm:$0x1]
      %v813 = vld [vmem:[%s810 + $0x2] sm:$0x1]
      %v814 = vld [vmem:[%s810 + $0x3] sm:$0x1]
      %v819 = vlaneseq
      %v820 = vshrl.u32 %v819, 7
      %v821 = vsub.s32 0, %v820
      %v822 = vrot.slane %v811, %v821
      %v823 = vlaneseq
      %v824 = vshrl.u32 %v823, 7
      %v825 = vsub.s32 0, %v824
      %v826 = vrot.slane %v812, %v825
      %v827 = vlaneseq
      %v828 = vshrl.u32 %v827, 7
      %v829 = vsub.s32 0, %v828
      %v830 = vrot.slane %v813, %v829
      %v831 = vlaneseq
      %v832 = vshrl.u32 %v831, 7
      %v833 = vsub.s32 0, %v832
      %v834 = vrot.slane %v814, %v833
      %v855 = vunpack.c.l.b16 %v746
      %v856 = vunpack.c.l.b16 %v747
      %v857 = vunpack.c.l.b16 %v748
      %v858 = vunpack.c.l.b16 %v749
      %v859 = vunpack.c.l.b16 %v750
      %v860 = vunpack.c.l.b16 %v751
      %v861 = vunpack.c.l.b16 %v752
      %v862 = vunpack.c.l.b16 %v753
      %v863 = vunpack.c.l.b16 %v754
      %v864 = vunpack.c.l.b16 %v755
      %v865 = vunpack.c.l.b16 %v756
      %v866 = vunpack.c.l.b16 %v757
      %v867 = vunpack.c.l.b16 %v758
      %v868 = vunpack.c.l.b16 %v759
      %v869 = vunpack.c.l.b16 %v760
      %v870 = vunpack.c.l.b16 %v761
      %v871 = vpack.c.b16 %v856, %v855
      %v872 = vpack.c.b16 %v858, %v857
      %v873 = vpack.c.b16 %v860, %v859
      %v874 = vpack.c.b16 %v862, %v861
      %v875 = vpack.c.b16 %v864, %v863
      %v876 = vpack.c.b16 %v866, %v865
      %v877 = vpack.c.b16 %v868, %v867
      %v878 = vpack.c.b16 %v870, %v869
      %887 = vmatprep.subr.bf16.mxu0 0
      %888 = vmatpush1.bf16.msra.mxu0 %v871
      %889 = vmatprep.subr.bf16.mxu0 0
      %890 = vmatpush1.bf16.msra.mxu0 %v872
      %891 = vmatprep.subr.bf16.mxu0 0
      %892 = vmatpush1.bf16.msra.mxu0 %v873
      %893 = vmatprep.subr.bf16.mxu0 0
      %894 = vmatpush1.bf16.msra.mxu0 %v874
      %895 = vmatprep.subr.bf16.mxu0 0
      %896 = vmatpush1.bf16.msra.mxu0 %v875
      %897 = vmatprep.subr.bf16.mxu0 0
      %898 = vmatpush1.bf16.msra.mxu0 %v876
      %899 = vmatprep.subr.bf16.mxu0 0
      %900 = vmatpush1.bf16.msra.mxu0 %v877
      %901 = vmatprep.subr.bf16.mxu0 0
      %902 = vmatpush1.bf16.msra.mxu0 %v878
      %903 = vmatprep.subr.bf16.mxu0 0
      %904 = vmatpush1.bf16.msra.mxu0 0
      %905 = vmatprep.subr.bf16.mxu0 0
      %906 = vmatpush1.bf16.msra.mxu0 0
      %907 = vmatprep.subr.bf16.mxu0 0
      %908 = vmatpush1.bf16.msra.mxu0 0
      %909 = vmatprep.subr.bf16.mxu0 0
      %910 = vmatpush1.bf16.msra.mxu0 0
      %911 = vmatprep.subr.bf16.mxu0 0
      %912 = vmatpush1.bf16.msra.mxu0 0
      %913 = vmatprep.subr.bf16.mxu0 0
      %914 = vmatpush1.bf16.msra.mxu0 0
      %915 = vmatprep.subr.bf16.mxu0 0
      %916 = vmatpush1.bf16.msra.mxu0 0
      %917 = vmatprep.subr.bf16.mxu0 0
      %918 = vmatpush1.bf16.msra.mxu0 0
      %919 = vmatprep.mubr.bf16.mxu0 0
      %920 = vmatmul.mubr.bf16.gmra.mrb[0].mxu0 %v300
      %v921 = vpop.f32.mrb[0].mxu0
      %v922 = vadd.f32 %v822, %v921
      %v923 = vpop.f32.mrb[0].mxu0
      %v924 = vpop.f32.mrb[0].mxu0
      %v925 = vpop.f32.mrb[0].mxu0
      %926 = vdwg.mxu0
      %v943 = vunpack.c.l.b16 %v762
      %v944 = vunpack.c.l.b16 %v763
      %v945 = vunpack.c.l.b16 %v764
      %v946 = vunpack.c.l.b16 %v765
      %v947 = vunpack.c.l.b16 %v766
      %v948 = vunpack.c.l.b16 %v767
      %v949 = vunpack.c.l.b16 %v768
      %v950 = vunpack.c.l.b16 %v769
      %v951 = vunpack.c.l.b16 %v770
      %v952 = vunpack.c.l.b16 %v771
      %v953 = vunpack.c.l.b16 %v772
      %v954 = vunpack.c.l.b16 %v773
      %v955 = vunpack.c.l.b16 %v774
      %v956 = vunpack.c.l.b16 %v775
      %v957 = vunpack.c.l.b16 %v776
      %v958 = vunpack.c.l.b16 %v777
      %v959 = vpack.c.b16 %v944, %v943
      %v960 = vpack.c.b16 %v946, %v945
      %v961 = vpack.c.b16 %v948, %v947
      %v962 = vpack.c.b16 %v950, %v949
      %v963 = vpack.c.b16 %v952, %v951
      %v964 = vpack.c.b16 %v954, %v953
      %v965 = vpack.c.b16 %v956, %v955
      %v966 = vpack.c.b16 %v958, %v957
      %975 = vmatprep.subr.bf16.mxu0 0
      %976 = vmatpush1.bf16.msra.mxu0 %v959
      %977 = vmatprep.subr.bf16.mxu0 0
      %978 = vmatpush1.bf16.msra.mxu0 %v960
      %979 = vmatprep.subr.bf16.mxu0 0
      %980 = vmatpush1.bf16.msra.mxu0 %v961
      %981 = vmatprep.subr.bf16.mxu0 0
      %982 = vmatpush1.bf16.msra.mxu0 %v962
      %983 = vmatprep.subr.bf16.mxu0 0
      %984 = vmatpush1.bf16.msra.mxu0 %v963
      %985 = vmatprep.subr.bf16.mxu0 0
      %986 = vmatpush1.bf16.msra.mxu0 %v964
      %987 = vmatprep.subr.bf16.mxu0 0
      %988 = vmatpush1.bf16.msra.mxu0 %v965
      %989 = vmatprep.subr.bf16.mxu0 0
      %990 = vmatpush1.bf16.msra.mxu0 %v966
      %991 = vmatprep.subr.bf16.mxu0 0
      %992 = vmatpush1.bf16.msra.mxu0 0
      %993 = vmatprep.subr.bf16.mxu0 0
      %994 = vmatpush1.bf16.msra.mxu0 0
      %995 = vmatprep.subr.bf16.mxu0 0
      %996 = vmatpush1.bf16.msra.mxu0 0
      %997 = vmatprep.subr.bf16.mxu0 0
      %998 = vmatpush1.bf16.msra.mxu0 0
      %999 = vmatprep.subr.bf16.mxu0 0
      %1000 = vmatpush1.bf16.msra.mxu0 0
      %1001 = vmatprep.subr.bf16.mxu0 0
      %1002 = vmatpush1.bf16.msra.mxu0 0
      %1003 = vmatprep.subr.bf16.mxu0 0
      %1004 = vmatpush1.bf16.msra.mxu0 0
      %1005 = vmatprep.subr.bf16.mxu0 0
      %1006 = vmatpush1.bf16.msra.mxu0 0
      %1007 = vmatprep.mubr.bf16.mxu0 0
      %1008 = vmatmul.mubr.bf16.gmra.mrb[0].mxu0 %v300
      %v1009 = vpop.f32.mrb[0].mxu0
      %v1010 = vadd.f32 %v826, %v1009
      %v1011 = vpop.f32.mrb[0].mxu0
      %v1012 = vpop.f32.mrb[0].mxu0
      %v1013 = vpop.f32.mrb[0].mxu0
      %1014 = vdwg.mxu0
      %v1031 = vunpack.c.l.b16 %v778
      %v1032 = vunpack.c.l.b16 %v779
      %v1033 = vunpack.c.l.b16 %v780
      %v1034 = vunpack.c.l.b16 %v781
      %v1035 = vunpack.c.l.b16 %v782
      %v1036 = vunpack.c.l.b16 %v783
      %v1037 = vunpack.c.l.b16 %v784
      %v1038 = vunpack.c.l.b16 %v785
      %v1039 = vunpack.c.l.b16 %v786
      %v1040 = vunpack.c.l.b16 %v787
      %v1041 = vunpack.c.l.b16 %v788
      %v1042 = vunpack.c.l.b16 %v789
      %v1043 = vunpack.c.l.b16 %v790
      %v1044 = vunpack.c.l.b16 %v791
      %v1045 = vunpack.c.l.b16 %v792
      %v1046 = vunpack.c.l.b16 %v793
      %v1047 = vpack.c.b16 %v1032, %v1031
      %v1048 = vpack.c.b16 %v1034, %v1033
      %v1049 = vpack.c.b16 %v1036, %v1035
      %v1050 = vpack.c.b16 %v1038, %v1037
      %v1051 = vpack.c.b16 %v1040, %v1039
      %v1052 = vpack.c.b16 %v1042, %v1041
      %v1053 = vpack.c.b16 %v1044, %v1043
      %v1054 = vpack.c.b16 %v1046, %v1045
      %1063 = vmatprep.subr.bf16.mxu0 0
      %1064 = vmatpush1.bf16.msra.mxu0 %v1047
      %1065 = vmatprep.subr.bf16.mxu0 0
      %1066 = vmatpush1.bf16.msra.mxu0 %v1048
      %1067 = vmatprep.subr.bf16.mxu0 0
      %1068 = vmatpush1.bf16.msra.mxu0 %v1049
      %1069 = vmatprep.subr.bf16.mxu0 0
      %1070 = vmatpush1.bf16.msra.mxu0 %v1050
      %1071 = vmatprep.subr.bf16.mxu0 0
      %1072 = vmatpush1.bf16.msra.mxu0 %v1051
      %1073 = vmatprep.subr.bf16.mxu0 0
      %1074 = vmatpush1.bf16.msra.mxu0 %v1052
      %1075 = vmatprep.subr.bf16.mxu0 0
      %1076 = vmatpush1.bf16.msra.mxu0 %v1053
      %1077 = vmatprep.subr.bf16.mxu0 0
      %1078 = vmatpush1.bf16.msra.mxu0 %v1054
      %1079 = vmatprep.subr.bf16.mxu0 0
      %1080 = vmatpush1.bf16.msra.mxu0 0
      %1081 = vmatprep.subr.bf16.mxu0 0
      %1082 = vmatpush1.bf16.msra.mxu0 0
      %1083 = vmatprep.subr.bf16.mxu0 0
      %1084 = vmatpush1.bf16.msra.mxu0 0
      %1085 = vmatprep.subr.bf16.mxu0 0
      %1086 = vmatpush1.bf16.msra.mxu0 0
      %1087 = vmatprep.subr.bf16.mxu0 0
      %1088 = vmatpush1.bf16.msra.mxu0 0
      %1089 = vmatprep.subr.bf16.mxu0 0
      %1090 = vmatpush1.bf16.msra.mxu0 0
      %1091 = vmatprep.subr.bf16.mxu0 0
      %1092 = vmatpush1.bf16.msra.mxu0 0
      %1093 = vmatprep.subr.bf16.mxu0 0
      %1094 = vmatpush1.bf16.msra.mxu0 0
      %1095 = vmatprep.mubr.bf16.mxu0 0
      %1096 = vmatmul.mubr.bf16.gmra.mrb[0].mxu0 %v300
      %v1097 = vpop.f32.mrb[0].mxu0
      %v1098 = vadd.f32 %v830, %v1097
      %v1099 = vpop.f32.mrb[0].mxu0
      %v1100 = vpop.f32.mrb[0].mxu0
      %v1101 = vpop.f32.mrb[0].mxu0
      %1102 = vdwg.mxu0
      %v1119 = vunpack.c.l.b16 %v794
      %v1120 = vunpack.c.l.b16 %v795
      %v1121 = vunpack.c.l.b16 %v796
      %v1122 = vunpack.c.l.b16 %v797
      %v1123 = vunpack.c.l.b16 %v798
      %v1124 = vunpack.c.l.b16 %v799
      %v1125 = vunpack.c.l.b16 %v800
      %v1126 = vunpack.c.l.b16 %v801
      %v1127 = vunpack.c.l.b16 %v802
      %v1128 = vunpack.c.l.b16 %v803
      %v1129 = vunpack.c.l.b16 %v804
      %v1130 = vunpack.c.l.b16 %v805
      %v1131 = vunpack.c.l.b16 %v806
      %v1132 = vunpack.c.l.b16 %v807
      %v1133 = vunpack.c.l.b16 %v808
      %v1134 = vunpack.c.l.b16 %v809
      %v1135 = vpack.c.b16 %v1120, %v1119
      %v1136 = vpack.c.b16 %v1122, %v1121
      %v1137 = vpack.c.b16 %v1124, %v1123
      %v1138 = vpack.c.b16 %v1126, %v1125
      %v1139 = vpack.c.b16 %v1128, %v1127
      %v1140 = vpack.c.b16 %v1130, %v1129
      %v1141 = vpack.c.b16 %v1132, %v1131
      %v1142 = vpack.c.b16 %v1134, %v1133
      %1151 = vmatprep.subr.bf16.mxu0 0
      %1152 = vmatpush1.bf16.msra.mxu0 %v1135
      %1153 = vmatprep.subr.bf16.mxu0 0
      %1154 = vmatpush1.bf16.msra.mxu0 %v1136
      %1155 = vmatprep.subr.bf16.mxu0 0
      %1156 = vmatpush1.bf16.msra.mxu0 %v1137
      %1157 = vmatprep.subr.bf16.mxu0 0
      %1158 = vmatpush1.bf16.msra.mxu0 %v1138
      %1159 = vmatprep.subr.bf16.mxu0 0
      %1160 = vmatpush1.bf16.msra.mxu0 %v1139
      %1161 = vmatprep.subr.bf16.mxu0 0
      %1162 = vmatpush1.bf16.msra.mxu0 %v1140
      %1163 = vmatprep.subr.bf16.mxu0 0
      %1164 = vmatpush1.bf16.msra.mxu0 %v1141
      %1165 = vmatprep.subr.bf16.mxu0 0
      %1166 = vmatpush1.bf16.msra.mxu0 %v1142
      %1167 = vmatprep.subr.bf16.mxu0 0
      %1168 = vmatpush1.bf16.msra.mxu0 0
      %1169 = vmatprep.subr.bf16.mxu0 0
      %1170 = vmatpush1.bf16.msra.mxu0 0
      %1171 = vmatprep.subr.bf16.mxu0 0
      %1172 = vmatpush1.bf16.msra.mxu0 0
      %1173 = vmatprep.subr.bf16.mxu0 0
      %1174 = vmatpush1.bf16.msra.mxu0 0
      %1175 = vmatprep.subr.bf16.mxu0 0
      %1176 = vmatpush1.bf16.msra.mxu0 0
      %1177 = vmatprep.subr.bf16.mxu0 0
      %1178 = vmatpush1.bf16.msra.mxu0 0
      %1179 = vmatprep.subr.bf16.mxu0 0
      %1180 = vmatpush1.bf16.msra.mxu0 0
      %1181 = vmatprep.subr.bf16.mxu0 0
      %1182 = vmatpush1.bf16.msra.mxu0 0
      %1183 = vmatprep.mubr.bf16.mxu0 0
      %1184 = vmatmul.mubr.bf16.gmra.mrb[0].mxu0 %v300
      %v1185 = vpop.f32.mrb[0].mxu0
      %v1186 = vadd.f32 %v834, %v1185
      %v1187 = vpop.f32.mrb[0].mxu0
      %v1188 = vpop.f32.mrb[0].mxu0
      %v1189 = vpop.f32.mrb[0].mxu0
      %1190 = vdwg.mxu0
      %s1191 = scalar_lea.vmem %s1, 512
      %v1192 = vld [vmem:[%s1191] sm:$0xf]
      %v1193 = vld [vmem:[%s1191 + $0x4] sm:$0xf]
      %v1194 = vld [vmem:[%s1191 + $0x8] sm:$0xf]
      %v1195 = vld [vmem:[%s1191 + $0xc] sm:$0xf]
      %v1196 = vld [vmem:[%s1191 + $0x10] sm:$0xf]
      %v1197 = vld [vmem:[%s1191 + $0x14] sm:$0xf]
      %v1198 = vld [vmem:[%s1191 + $0x18] sm:$0xf]
      %v1199 = vld [vmem:[%s1191 + $0x1c] sm:$0xf]
      %v1200 = vld [vmem:[%s1191 + $0x20] sm:$0xf]
      %v1201 = vld [vmem:[%s1191 + $0x24] sm:$0xf]
      %v1202 = vld [vmem:[%s1191 + $0x28] sm:$0xf]
      %v1203 = vld [vmem:[%s1191 + $0x2c] sm:$0xf]
      %v1204 = vld [vmem:[%s1191 + $0x30] sm:$0xf]
      %v1205 = vld [vmem:[%s1191 + $0x34] sm:$0xf]
      %v1206 = vld [vmem:[%s1191 + $0x38] sm:$0xf]
      %v1207 = vld [vmem:[%s1191 + $0x3c] sm:$0xf]
      %v1208 = vld [vmem:[%s1191 + $0x40] sm:$0xf]
      %v1209 = vld [vmem:[%s1191 + $0x44] sm:$0xf]
      %v1210 = vld [vmem:[%s1191 + $0x48] sm:$0xf]
      %v1211 = vld [vmem:[%s1191 + $0x4c] sm:$0xf]
      %v1212 = vld [vmem:[%s1191 + $0x50] sm:$0xf]
      %v1213 = vld [vmem:[%s1191 + $0x54] sm:$0xf]
      %v1214 = vld [vmem:[%s1191 + $0x58] sm:$0xf]
      %v1215 = vld [vmem:[%s1191 + $0x5c] sm:$0xf]
      %v1216 = vld [vmem:[%s1191 + $0x60] sm:$0xf]
      %v1217 = vld [vmem:[%s1191 + $0x64] sm:$0xf]
      %v1218 = vld [vmem:[%s1191 + $0x68] sm:$0xf]
      %v1219 = vld [vmem:[%s1191 + $0x6c] sm:$0xf]
      %v1220 = vld [vmem:[%s1191 + $0x70] sm:$0xf]
      %v1221 = vld [vmem:[%s1191 + $0x74] sm:$0xf]
      %v1222 = vld [vmem:[%s1191 + $0x78] sm:$0xf]
      %v1223 = vld [vmem:[%s1191 + $0x7c] sm:$0xf]
      %v1224 = vld [vmem:[%s1191 + $0x80] sm:$0xf]
      %v1225 = vld [vmem:[%s1191 + $0x84] sm:$0xf]
      %v1226 = vld [vmem:[%s1191 + $0x88] sm:$0xf]
      %v1227 = vld [vmem:[%s1191 + $0x8c] sm:$0xf]
      %v1228 = vld [vmem:[%s1191 + $0x90] sm:$0xf]
      %v1229 = vld [vmem:[%s1191 + $0x94] sm:$0xf]
      %v1230 = vld [vmem:[%s1191 + $0x98] sm:$0xf]
      %v1231 = vld [vmem:[%s1191 + $0x9c] sm:$0xf]
      %v1232 = vld [vmem:[%s1191 + $0xa0] sm:$0xf]
      %v1233 = vld [vmem:[%s1191 + $0xa4] sm:$0xf]
      %v1234 = vld [vmem:[%s1191 + $0xa8] sm:$0xf]
      %v1235 = vld [vmem:[%s1191 + $0xac] sm:$0xf]
      %v1236 = vld [vmem:[%s1191 + $0xb0] sm:$0xf]
      %v1237 = vld [vmem:[%s1191 + $0xb4] sm:$0xf]
      %v1238 = vld [vmem:[%s1191 + $0xb8] sm:$0xf]
      %v1239 = vld [vmem:[%s1191 + $0xbc] sm:$0xf]
      %v1240 = vld [vmem:[%s1191 + $0xc0] sm:$0xf]
      %v1241 = vld [vmem:[%s1191 + $0xc4] sm:$0xf]
      %v1242 = vld [vmem:[%s1191 + $0xc8] sm:$0xf]
      %v1243 = vld [vmem:[%s1191 + $0xcc] sm:$0xf]
      %v1244 = vld [vmem:[%s1191 + $0xd0] sm:$0xf]
      %v1245 = vld [vmem:[%s1191 + $0xd4] sm:$0xf]
      %v1246 = vld [vmem:[%s1191 + $0xd8] sm:$0xf]
      %v1247 = vld [vmem:[%s1191 + $0xdc] sm:$0xf]
      %v1248 = vld [vmem:[%s1191 + $0xe0] sm:$0xf]
      %v1249 = vld [vmem:[%s1191 + $0xe4] sm:$0xf]
      %v1250 = vld [vmem:[%s1191 + $0xe8] sm:$0xf]
      %v1251 = vld [vmem:[%s1191 + $0xec] sm:$0xf]
      %v1252 = vld [vmem:[%s1191 + $0xf0] sm:$0xf]
      %v1253 = vld [vmem:[%s1191 + $0xf4] sm:$0xf]
      %v1254 = vld [vmem:[%s1191 + $0xf8] sm:$0xf]
      %v1255 = vld [vmem:[%s1191 + $0xfc] sm:$0xf]
      %s1256 = scalar_lea.vmem %s5, 8
      %v1257 = vld [vmem:[%s1256] sm:$0x1]
      %v1258 = vld [vmem:[%s1256 + $0x1] sm:$0x1]
      %v1259 = vld [vmem:[%s1256 + $0x2] sm:$0x1]
      %v1260 = vld [vmem:[%s1256 + $0x3] sm:$0x1]
      %v1265 = vlaneseq
      %v1266 = vshrl.u32 %v1265, 7
      %v1267 = vsub.s32 0, %v1266
      %v1268 = vrot.slane %v1257, %v1267
      %v1269 = vlaneseq
      %v1270 = vshrl.u32 %v1269, 7
      %v1271 = vsub.s32 0, %v1270
      %v1272 = vrot.slane %v1258, %v1271
      %v1273 = vlaneseq
      %v1274 = vshrl.u32 %v1273, 7
      %v1275 = vsub.s32 0, %v1274
      %v1276 = vrot.slane %v1259, %v1275
      %v1277 = vlaneseq
      %v1278 = vshrl.u32 %v1277, 7
      %v1279 = vsub.s32 0, %v1278
      %v1280 = vrot.slane %v1260, %v1279
      %v1301 = vunpack.c.l.b16 %v1192
      %v1302 = vunpack.c.l.b16 %v1193
      %v1303 = vunpack.c.l.b16 %v1194
      %v1304 = vunpack.c.l.b16 %v1195
      %v1305 = vunpack.c.l.b16 %v1196
      %v1306 = vunpack.c.l.b16 %v1197
      %v1307 = vunpack.c.l.b16 %v1198
      %v1308 = vunpack.c.l.b16 %v1199
      %v1309 = vunpack.c.l.b16 %v1200
      %v1310 = vunpack.c.l.b16 %v1201
      %v1311 = vunpack.c.l.b16 %v1202
      %v1312 = vunpack.c.l.b16 %v1203
      %v1313 = vunpack.c.l.b16 %v1204
      %v1314 = vunpack.c.l.b16 %v1205
      %v1315 = vunpack.c.l.b16 %v1206
      %v1316 = vunpack.c.l.b16 %v1207
      %v1317 = vpack.c.b16 %v1302, %v1301
      %v1318 = vpack.c.b16 %v1304, %v1303
      %v1319 = vpack.c.b16 %v1306, %v1305
      %v1320 = vpack.c.b16 %v1308, %v1307
      %v1321 = vpack.c.b16 %v1310, %v1309
      %v1322 = vpack.c.b16 %v1312, %v1311
      %v1323 = vpack.c.b16 %v1314, %v1313
      %v1324 = vpack.c.b16 %v1316, %v1315
      %1333 = vmatprep.subr.bf16.mxu0 0
      %1334 = vmatpush1.bf16.msra.mxu0 %v1317
      %1335 = vmatprep.subr.bf16.mxu0 0
      %1336 = vmatpush1.bf16.msra.mxu0 %v1318
      %1337 = vmatprep.subr.bf16.mxu0 0
      %1338 = vmatpush1.bf16.msra.mxu0 %v1319
      %1339 = vmatprep.subr.bf16.mxu0 0
      %1340 = vmatpush1.bf16.msra.mxu0 %v1320
      %1341 = vmatprep.subr.bf16.mxu0 0
      %1342 = vmatpush1.bf16.msra.mxu0 %v1321
      %1343 = vmatprep.subr.bf16.mxu0 0
      %1344 = vmatpush1.bf16.msra.mxu0 %v1322
      %1345 = vmatprep.subr.bf16.mxu0 0
      %1346 = vmatpush1.bf16.msra.mxu0 %v1323
      %1347 = vmatprep.subr.bf16.mxu0 0
      %1348 = vmatpush1.bf16.msra.mxu0 %v1324
      %1349 = vmatprep.subr.bf16.mxu0 0
      %1350 = vmatpush1.bf16.msra.mxu0 0
      %1351 = vmatprep.subr.bf16.mxu0 0
      %1352 = vmatpush1.bf16.msra.mxu0 0
      %1353 = vmatprep.subr.bf16.mxu0 0
      %1354 = vmatpush1.bf16.msra.mxu0 0
      %1355 = vmatprep.subr.bf16.mxu0 0
      %1356 = vmatpush1.bf16.msra.mxu0 0
      %1357 = vmatprep.subr.bf16.mxu0 0
      %1358 = vmatpush1.bf16.msra.mxu0 0
      %1359 = vmatprep.subr.bf16.mxu0 0
      %1360 = vmatpush1.bf16.msra.mxu0 0
      %1361 = vmatprep.subr.bf16.mxu0 0
      %1362 = vmatpush1.bf16.msra.mxu0 0
      %1363 = vmatprep.subr.bf16.mxu0 0
      %1364 = vmatpush1.bf16.msra.mxu0 0
      %1365 = vmatprep.mubr.bf16.mxu0 0
      %1366 = vmatmul.mubr.bf16.gmra.mrb[0].mxu0 %v300
      %v1367 = vpop.f32.mrb[0].mxu0
      %v1368 = vadd.f32 %v1268, %v1367
      %v1369 = vpop.f32.mrb[0].mxu0
      %v1370 = vpop.f32.mrb[0].mxu0
      %v1371 = vpop.f32.mrb[0].mxu0
      %1372 = vdwg.mxu0
      %v1389 = vunpack.c.l.b16 %v1208
      %v1390 = vunpack.c.l.b16 %v1209
      %v1391 = vunpack.c.l.b16 %v1210
      %v1392 = vunpack.c.l.b16 %v1211
      %v1393 = vunpack.c.l.b16 %v1212
      %v1394 = vunpack.c.l.b16 %v1213
      %v1395 = vunpack.c.l.b16 %v1214
      %v1396 = vunpack.c.l.b16 %v1215
      %v1397 = vunpack.c.l.b16 %v1216
      %v1398 = vunpack.c.l.b16 %v1217
      %v1399 = vunpack.c.l.b16 %v1218
      %v1400 = vunpack.c.l.b16 %v1219
      %v1401 = vunpack.c.l.b16 %v1220
      %v1402 = vunpack.c.l.b16 %v1221
      %v1403 = vunpack.c.l.b16 %v1222
      %v1404 = vunpack.c.l.b16 %v1223
      %v1405 = vpack.c.b16 %v1390, %v1389
      %v1406 = vpack.c.b16 %v1392, %v1391
      %v1407 = vpack.c.b16 %v1394, %v1393
      %v1408 = vpack.c.b16 %v1396, %v1395
      %v1409 = vpack.c.b16 %v1398, %v1397
      %v1410 = vpack.c.b16 %v1400, %v1399
      %v1411 = vpack.c.b16 %v1402, %v1401
      %v1412 = vpack.c.b16 %v1404, %v1403
      %1421 = vmatprep.subr.bf16.mxu0 0
      %1422 = vmatpush1.bf16.msra.mxu0 %v1405
      %1423 = vmatprep.subr.bf16.mxu0 0
      %1424 = vmatpush1.bf16.msra.mxu0 %v1406
      %1425 = vmatprep.subr.bf16.mxu0 0
      %1426 = vmatpush1.bf16.msra.mxu0 %v1407
      %1427 = vmatprep.subr.bf16.mxu0 0
      %1428 = vmatpush1.bf16.msra.mxu0 %v1408
      %1429 = vmatprep.subr.bf16.mxu0 0
      %1430 = vmatpush1.bf16.msra.mxu0 %v1409
      %1431 = vmatprep.subr.bf16.mxu0 0
      %1432 = vmatpush1.bf16.msra.mxu0 %v1410
      %1433 = vmatprep.subr.bf16.mxu0 0
      %1434 = vmatpush1.bf16.msra.mxu0 %v1411
      %1435 = vmatprep.subr.bf16.mxu0 0
      %1436 = vmatpush1.bf16.msra.mxu0 %v1412
      %1437 = vmatprep.subr.bf16.mxu0 0
      %1438 = vmatpush1.bf16.msra.mxu0 0
      %1439 = vmatprep.subr.bf16.mxu0 0
      %1440 = vmatpush1.bf16.msra.mxu0 0
      %1441 = vmatprep.subr.bf16.mxu0 0
      %1442 = vmatpush1.bf16.msra.mxu0 0
      %1443 = vmatprep.subr.bf16.mxu0 0
      %1444 = vmatpush1.bf16.msra.mxu0 0
      %1445 = vmatprep.subr.bf16.mxu0 0
      %1446 = vmatpush1.bf16.msra.mxu0 0
      %1447 = vmatprep.subr.bf16.mxu0 0
      %1448 = vmatpush1.bf16.msra.mxu0 0
      %1449 = vmatprep.subr.bf16.mxu0 0
      %1450 = vmatpush1.bf16.msra.mxu0 0
      %1451 = vmatprep.subr.bf16.mxu0 0
      %1452 = vmatpush1.bf16.msra.mxu0 0
      %1453 = vmatprep.mubr.bf16.mxu0 0
      %1454 = vmatmul.mubr.bf16.gmra.mrb[0].mxu0 %v300
      %v1455 = vpop.f32.mrb[0].mxu0
      %v1456 = vadd.f32 %v1272, %v1455
      %v1457 = vpop.f32.mrb[0].mxu0
      %v1458 = vpop.f32.mrb[0].mxu0
      %v1459 = vpop.f32.mrb[0].mxu0
      %1460 = vdwg.mxu0
      %v1477 = vunpack.c.l.b16 %v1224
      %v1478 = vunpack.c.l.b16 %v1225
      %v1479 = vunpack.c.l.b16 %v1226
      %v1480 = vunpack.c.l.b16 %v1227
      %v1481 = vunpack.c.l.b16 %v1228
      %v1482 = vunpack.c.l.b16 %v1229
      %v1483 = vunpack.c.l.b16 %v1230
      %v1484 = vunpack.c.l.b16 %v1231
      %v1485 = vunpack.c.l.b16 %v1232
      %v1486 = vunpack.c.l.b16 %v1233
      %v1487 = vunpack.c.l.b16 %v1234
      %v1488 = vunpack.c.l.b16 %v1235
      %v1489 = vunpack.c.l.b16 %v1236
      %v1490 = vunpack.c.l.b16 %v1237
      %v1491 = vunpack.c.l.b16 %v1238
      %v1492 = vunpack.c.l.b16 %v1239
      %v1493 = vpack.c.b16 %v1478, %v1477
      %v1494 = vpack.c.b16 %v1480, %v1479
      %v1495 = vpack.c.b16 %v1482, %v1481
      %v1496 = vpack.c.b16 %v1484, %v1483
      %v1497 = vpack.c.b16 %v1486, %v1485
      %v1498 = vpack.c.b16 %v1488, %v1487
      %v1499 = vpack.c.b16 %v1490, %v1489
      %v1500 = vpack.c.b16 %v1492, %v1491
      %1509 = vmatprep.subr.bf16.mxu0 0
      %1510 = vmatpush1.bf16.msra.mxu0 %v1493
      %1511 = vmatprep.subr.bf16.mxu0 0
      %1512 = vmatpush1.bf16.msra.mxu0 %v1494
      %1513 = vmatprep.subr.bf16.mxu0 0
      %1514 = vmatpush1.bf16.msra.mxu0 %v1495
      %1515 = vmatprep.subr.bf16.mxu0 0
      %1516 = vmatpush1.bf16.msra.mxu0 %v1496
      %1517 = vmatprep.subr.bf16.mxu0 0
      %1518 = vmatpush1.bf16.msra.mxu0 %v1497
      %1519 = vmatprep.subr.bf16.mxu0 0
      %1520 = vmatpush1.bf16.msra.mxu0 %v1498
      %1521 = vmatprep.subr.bf16.mxu0 0
      %1522 = vmatpush1.bf16.msra.mxu0 %v1499
      %1523 = vmatprep.subr.bf16.mxu0 0
      %1524 = vmatpush1.bf16.msra.mxu0 %v1500
      %1525 = vmatprep.subr.bf16.mxu0 0
      %1526 = vmatpush1.bf16.msra.mxu0 0
      %1527 = vmatprep.subr.bf16.mxu0 0
      %1528 = vmatpush1.bf16.msra.mxu0 0
      %1529 = vmatprep.subr.bf16.mxu0 0
      %1530 = vmatpush1.bf16.msra.mxu0 0
      %1531 = vmatprep.subr.bf16.mxu0 0
      %1532 = vmatpush1.bf16.msra.mxu0 0
      %1533 = vmatprep.subr.bf16.mxu0 0
      %1534 = vmatpush1.bf16.msra.mxu0 0
      %1535 = vmatprep.subr.bf16.mxu0 0
      %1536 = vmatpush1.bf16.msra.mxu0 0
      %1537 = vmatprep.subr.bf16.mxu0 0
      %1538 = vmatpush1.bf16.msra.mxu0 0
      %1539 = vmatprep.subr.bf16.mxu0 0
      %1540 = vmatpush1.bf16.msra.mxu0 0
      %1541 = vmatprep.mubr.bf16.mxu0 0
      %1542 = vmatmul.mubr.bf16.gmra.mrb[0].mxu0 %v300
      %v1543 = vpop.f32.mrb[0].mxu0
      %v1544 = vadd.f32 %v1276, %v1543
      %v1545 = vpop.f32.mrb[0].mxu0
      %v1546 = vpop.f32.mrb[0].mxu0
      %v1547 = vpop.f32.mrb[0].mxu0
      %1548 = vdwg.mxu0
      %v1565 = vunpack.c.l.b16 %v1240
      %v1566 = vunpack.c.l.b16 %v1241
      %v1567 = vunpack.c.l.b16 %v1242
      %v1568 = vunpack.c.l.b16 %v1243
      %v1569 = vunpack.c.l.b16 %v1244
      %v1570 = vunpack.c.l.b16 %v1245
      %v1571 = vunpack.c.l.b16 %v1246
      %v1572 = vunpack.c.l.b16 %v1247
      %v1573 = vunpack.c.l.b16 %v1248
      %v1574 = vunpack.c.l.b16 %v1249
      %v1575 = vunpack.c.l.b16 %v1250
      %v1576 = vunpack.c.l.b16 %v1251
      %v1577 = vunpack.c.l.b16 %v1252
      %v1578 = vunpack.c.l.b16 %v1253
      %v1579 = vunpack.c.l.b16 %v1254
      %v1580 = vunpack.c.l.b16 %v1255
      %v1581 = vpack.c.b16 %v1566, %v1565
      %v1582 = vpack.c.b16 %v1568, %v1567
      %v1583 = vpack.c.b16 %v1570, %v1569
      %v1584 = vpack.c.b16 %v1572, %v1571
      %v1585 = vpack.c.b16 %v1574, %v1573
      %v1586 = vpack.c.b16 %v1576, %v1575
      %v1587 = vpack.c.b16 %v1578, %v1577
      %v1588 = vpack.c.b16 %v1580, %v1579
      %1597 = vmatprep.subr.bf16.mxu0 0
      %1598 = vmatpush1.bf16.msra.mxu0 %v1581
      %1599 = vmatprep.subr.bf16.mxu0 0
      %1600 = vmatpush1.bf16.msra.mxu0 %v1582
      %1601 = vmatprep.subr.bf16.mxu0 0
      %1602 = vmatpush1.bf16.msra.mxu0 %v1583
      %1603 = vmatprep.subr.bf16.mxu0 0
      %1604 = vmatpush1.bf16.msra.mxu0 %v1584
      %1605 = vmatprep.subr.bf16.mxu0 0
      %1606 = vmatpush1.bf16.msra.mxu0 %v1585
      %1607 = vmatprep.subr.bf16.mxu0 0
      %1608 = vmatpush1.bf16.msra.mxu0 %v1586
      %1609 = vmatprep.subr.bf16.mxu0 0
      %1610 = vmatpush1.bf16.msra.mxu0 %v1587
      %1611 = vmatprep.subr.bf16.mxu0 0
      %1612 = vmatpush1.bf16.msra.mxu0 %v1588
      %1613 = vmatprep.subr.bf16.mxu0 0
      %1614 = vmatpush1.bf16.msra.mxu0 0
      %1615 = vmatprep.subr.bf16.mxu0 0
      %1616 = vmatpush1.bf16.msra.mxu0 0
      %1617 = vmatprep.subr.bf16.mxu0 0
      %1618 = vmatpush1.bf16.msra.mxu0 0
      %1619 = vmatprep.subr.bf16.mxu0 0
      %1620 = vmatpush1.bf16.msra.mxu0 0
      %1621 = vmatprep.subr.bf16.mxu0 0
      %1622 = vmatpush1.bf16.msra.mxu0 0
      %1623 = vmatprep.subr.bf16.mxu0 0
      %1624 = vmatpush1.bf16.msra.mxu0 0
      %1625 = vmatprep.subr.bf16.mxu0 0
      %1626 = vmatpush1.bf16.msra.mxu0 0
      %1627 = vmatprep.subr.bf16.mxu0 0
      %1628 = vmatpush1.bf16.msra.mxu0 0
      %1629 = vmatprep.mubr.bf16.mxu0 0
      %1630 = vmatmul.mubr.bf16.gmra.mrb[0].mxu0 %v300
      %v1631 = vpop.f32.mrb[0].mxu0
      %v1632 = vadd.f32 %v1280, %v1631
      %v1633 = vpop.f32.mrb[0].mxu0
      %v1634 = vpop.f32.mrb[0].mxu0
      %v1635 = vpop.f32.mrb[0].mxu0
      %1636 = vdwg.mxu0
      %v1637 = vpack.c.bf16 %v476, %v476
      %v1638 = vpack.c.bf16 %v564, %v564
      %v1639 = vpack.c.bf16 %v652, %v652
      %v1640 = vpack.c.bf16 %v740, %v740
      %v1641 = vpack.c.bf16 %v922, %v922
      %v1642 = vpack.c.bf16 %v1010, %v1010
      %v1643 = vpack.c.bf16 %v1098, %v1098
      %v1644 = vpack.c.bf16 %v1186, %v1186
      %vm1645 = vcmask 64512
      %v1647 = vsel %vm1645, %v1637, 0
      %v1650 = vsel %vm1645, %v1641, 0
      %1652 = vmatprep.subr.bf16.mxu0 0
      %1653 = vmatpush1.bf16.xpose.msra.mxu0 %v1650
      %1654 = vmatprep.subr.bf16.mxu0 0
      %1655 = vmatpush1.bf16.xpose.msra.mxu0 0
      %1656 = vmatprep.subr.bf16.mxu0 0
      %1657 = vmatpush1.bf16.xpose.msra.mxu0 0
      %1658 = vmatprep.subr.bf16.mxu0 0
      %1659 = vmatpush1.bf16.xpose.msra.mxu0 0
      %1660 = vmatprep.subr.bf16.mxu0 0
      %1661 = vmatpush1.bf16.xpose.msra.mxu0 0
      %1662 = vmatprep.subr.bf16.mxu0 0
      %1663 = vmatpush1.bf16.xpose.msra.mxu0 0
      %1664 = vmatprep.subr.bf16.mxu0 0
      %1665 = vmatpush1.bf16.xpose.msra.mxu0 0
      %1666 = vmatprep.subr.bf16.mxu0 0
      %1667 = vmatpush1.bf16.xpose.msra.mxu0 0
      %1668 = vmatprep.subr.bf16.mxu0 0
      %1669 = vmatpush1.bf16.xpose.msra.mxu0 0
      %1670 = vmatprep.subr.bf16.mxu0 0
      %1671 = vmatpush1.bf16.xpose.msra.mxu0 0
      %1672 = vmatprep.subr.bf16.mxu0 0
      %1673 = vmatpush1.bf16.xpose.msra.mxu0 0
      %1674 = vmatprep.subr.bf16.mxu0 0
      %1675 = vmatpush1.bf16.xpose.msra.mxu0 0
      %1676 = vmatprep.subr.bf16.mxu0 0
      %1677 = vmatpush1.bf16.xpose.msra.mxu0 0
      %1678 = vmatprep.subr.bf16.mxu0 0
      %1679 = vmatpush1.bf16.xpose.msra.mxu0 0
      %1680 = vmatprep.subr.bf16.mxu0 0
      %1681 = vmatpush1.bf16.xpose.msra.mxu0 0
      %1682 = vmatprep.subr.bf16.mxu0 0
      %1683 = vmatpush1.bf16.xpose.msra.mxu0 0
      %1684 = vmatprep.mubr.bf16.mxu0 0
      %1685 = vmatmul.mubr.bf16.gmra.mrb[0].mxu0 %v1647
      %v1686 = vpop.f32.mrb[0].mxu0
      %v1687 = vadd.f32 0.0, %v1686
      %v1688 = vpop.f32.mrb[0].mxu0
      %v1689 = vpop.f32.mrb[0].mxu0
      %v1690 = vpop.f32.mrb[0].mxu0
      %1691 = vdwg.mxu0
      %v1693 = vsel %vm1645, %v1638, 0
      %v1696 = vsel %vm1645, %v1642, 0
      %1698 = vmatprep.subr.bf16.mxu0 0
      %1699 = vmatpush1.bf16.xpose.msra.mxu0 %v1696
      %1700 = vmatprep.subr.bf16.mxu0 0
      %1701 = vmatpush1.bf16.xpose.msra.mxu0 0
      %1702 = vmatprep.subr.bf16.mxu0 0
      %1703 = vmatpush1.bf16.xpose.msra.mxu0 0
      %1704 = vmatprep.subr.bf16.mxu0 0
      %1705 = vmatpush1.bf16.xpose.msra.mxu0 0
      %1706 = vmatprep.subr.bf16.mxu0 0
      %1707 = vmatpush1.bf16.xpose.msra.mxu0 0
      %1708 = vmatprep.subr.bf16.mxu0 0
      %1709 = vmatpush1.bf16.xpose.msra.mxu0 0
      %1710 = vmatprep.subr.bf16.mxu0 0
      %1711 = vmatpush1.bf16.xpose.msra.mxu0 0
      %1712 = vmatprep.subr.bf16.mxu0 0
      %1713 = vmatpush1.bf16.xpose.msra.mxu0 0
      %1714 = vmatprep.subr.bf16.mxu0 0
      %1715 = vmatpush1.bf16.xpose.msra.mxu0 0
      %1716 = vmatprep.subr.bf16.mxu0 0
      %1717 = vmatpush1.bf16.xpose.msra.mxu0 0
      %1718 = vmatprep.subr.bf16.mxu0 0
      %1719 = vmatpush1.bf16.xpose.msra.mxu0 0
      %1720 = vmatprep.subr.bf16.mxu0 0
      %1721 = vmatpush1.bf16.xpose.msra.mxu0 0
      %1722 = vmatprep.subr.bf16.mxu0 0
      %1723 = vmatpush1.bf16.xpose.msra.mxu0 0
      %1724 = vmatprep.subr.bf16.mxu0 0
      %1725 = vmatpush1.bf16.xpose.msra.mxu0 0
      %1726 = vmatprep.subr.bf16.mxu0 0
      %1727 = vmatpush1.bf16.xpose.msra.mxu0 0
      %1728 = vmatprep.subr.bf16.mxu0 0
      %1729 = vmatpush1.bf16.xpose.msra.mxu0 0
      %1730 = vmatprep.mubr.bf16.mxu0 0
      %1731 = vmatmul.mubr.bf16.gmra.mrb[0].mxu0 %v1693
      %v1732 = vpop.f32.mrb[0].mxu0
      %v1733 = vadd.f32 0.0, %v1732
      %v1734 = vpop.f32.mrb[0].mxu0
      %v1735 = vpop.f32.mrb[0].mxu0
      %v1736 = vpop.f32.mrb[0].mxu0
      %1737 = vdwg.mxu0
      %v1739 = vsel %vm1645, %v1639, 0
      %v1742 = vsel %vm1645, %v1643, 0
      %1744 = vmatprep.subr.bf16.mxu0 0
      %1745 = vmatpush1.bf16.xpose.msra.mxu0 %v1742
      %1746 = vmatprep.subr.bf16.mxu0 0
      %1747 = vmatpush1.bf16.xpose.msra.mxu0 0
      %1748 = vmatprep.subr.bf16.mxu0 0
      %1749 = vmatpush1.bf16.xpose.msra.mxu0 0
      %1750 = vmatprep.subr.bf16.mxu0 0
      %1751 = vmatpush1.bf16.xpose.msra.mxu0 0
      %1752 = vmatprep.subr.bf16.mxu0 0
      %1753 = vmatpush1.bf16.xpose.msra.mxu0 0
      %1754 = vmatprep.subr.bf16.mxu0 0
      %1755 = vmatpush1.bf16.xpose.msra.mxu0 0
      %1756 = vmatprep.subr.bf16.mxu0 0
      %1757 = vmatpush1.bf16.xpose.msra.mxu0 0
      %1758 = vmatprep.subr.bf16.mxu0 0
      %1759 = vmatpush1.bf16.xpose.msra.mxu0 0
      %1760 = vmatprep.subr.bf16.mxu0 0
      %1761 = vmatpush1.bf16.xpose.msra.mxu0 0
      %1762 = vmatprep.subr.bf16.mxu0 0
      %1763 = vmatpush1.bf16.xpose.msra.mxu0 0
      %1764 = vmatprep.subr.bf16.mxu0 0
      %1765 = vmatpush1.bf16.xpose.msra.mxu0 0
      %1766 = vmatprep.subr.bf16.mxu0 0
      %1767 = vmatpush1.bf16.xpose.msra.mxu0 0
      %1768 = vmatprep.subr.bf16.mxu0 0
      %1769 = vmatpush1.bf16.xpose.msra.mxu0 0
      %1770 = vmatprep.subr.bf16.mxu0 0
      %1771 = vmatpush1.bf16.xpose.msra.mxu0 0
      %1772 = vmatprep.subr.bf16.mxu0 0
      %1773 = vmatpush1.bf16.xpose.msra.mxu0 0
      %1774 = vmatprep.subr.bf16.mxu0 0
      %1775 = vmatpush1.bf16.xpose.msra.mxu0 0
      %1776 = vmatprep.mubr.bf16.mxu0 0
      %1777 = vmatmul.mubr.bf16.gmra.mrb[0].mxu0 %v1739
      %v1778 = vpop.f32.mrb[0].mxu0
      %v1779 = vadd.f32 0.0, %v1778
      %v1780 = vpop.f32.mrb[0].mxu0
      %v1781 = vpop.f32.mrb[0].mxu0
      %v1782 = vpop.f32.mrb[0].mxu0
      %1783 = vdwg.mxu0
      %v1785 = vsel %vm1645, %v1640, 0
      %v1788 = vsel %vm1645, %v1644, 0
      %1790 = vmatprep.subr.bf16.mxu0 0
      %1791 = vmatpush1.bf16.xpose.msra.mxu0 %v1788
      %1792 = vmatprep.subr.bf16.mxu0 0
      %1793 = vmatpush1.bf16.xpose.msra.mxu0 0
      %1794 = vmatprep.subr.bf16.mxu0 0
      %1795 = vmatpush1.bf16.xpose.msra.mxu0 0
      %1796 = vmatprep.subr.bf16.mxu0 0
      %1797 = vmatpush1.bf16.xpose.msra.mxu0 0
      %1798 = vmatprep.subr.bf16.mxu0 0
      %1799 = vmatpush1.bf16.xpose.msra.mxu0 0
      %1800 = vmatprep.subr.bf16.mxu0 0
      %1801 = vmatpush1.bf16.xpose.msra.mxu0 0
      %1802 = vmatprep.subr.bf16.mxu0 0
      %1803 = vmatpush1.bf16.xpose.msra.mxu0 0
      %1804 = vmatprep.subr.bf16.mxu0 0
      %1805 = vmatpush1.bf16.xpose.msra.mxu0 0
      %1806 = vmatprep.subr.bf16.mxu0 0
      %1807 = vmatpush1.bf16.xpose.msra.mxu0 0
      %1808 = vmatprep.subr.bf16.mxu0 0
      %1809 = vmatpush1.bf16.xpose.msra.mxu0 0
      %1810 = vmatprep.subr.bf16.mxu0 0
      %1811 = vmatpush1.bf16.xpose.msra.mxu0 0
      %1812 = vmatprep.subr.bf16.mxu0 0
      %1813 = vmatpush1.bf16.xpose.msra.mxu0 0
      %1814 = vmatprep.subr.bf16.mxu0 0
      %1815 = vmatpush1.bf16.xpose.msra.mxu0 0
      %1816 = vmatprep.subr.bf16.mxu0 0
      %1817 = vmatpush1.bf16.xpose.msra.mxu0 0
      %1818 = vmatprep.subr.bf16.mxu0 0
      %1819 = vmatpush1.bf16.xpose.msra.mxu0 0
      %1820 = vmatprep.subr.bf16.mxu0 0
      %1821 = vmatpush1.bf16.xpose.msra.mxu0 0
      %1822 = vmatprep.mubr.bf16.mxu0 0
      %1823 = vmatmul.mubr.bf16.gmra.mrb[0].mxu0 %v1785
      %v1824 = vpop.f32.mrb[0].mxu0
      %v1825 = vadd.f32 0.0, %v1824
      %v1826 = vpop.f32.mrb[0].mxu0
      %v1827 = vpop.f32.mrb[0].mxu0
      %v1828 = vpop.f32.mrb[0].mxu0
      %1829 = vdwg.mxu0
      %v1830 = vsel %vm1645, %v1687, -inf
      %1831 = vmax.xlane.f32.xlu0 %v1830
      %v1832 = vpop.xlane.xlu0 %1831
      %v1833 = vsel %vm1645, %v1733, -inf
      %1834 = vmax.xlane.f32.xlu0 %v1833
      %v1835 = vpop.xlane.xlu0 %1834
      %v1836 = vsel %vm1645, %v1779, -inf
      %1837 = vmax.xlane.f32.xlu0 %v1836
      %v1838 = vpop.xlane.xlu0 %1837
      %v1839 = vsel %vm1645, %v1825, -inf
      %1840 = vmax.xlane.f32.xlu0 %v1839
      %v1841 = vpop.xlane.xlu0 %1840
      %v1842 = vsub.f32 %v1687, %v1832
      %v1843 = vsub.f32 %v1733, %v1835
      %v1844 = vsub.f32 %v1779, %v1838
      %v1845 = vsub.f32 %v1825, %v1841
      %v1846 = vmul.f32 %v1842, 1.442695
      %v1847 = vpow.pop %v1846
      %v1848 = vmul.f32 %v1843, 1.442695
      %v1849 = vpow.pop %v1848
      %v1850 = vmul.f32 %v1844, 1.442695
      %v1851 = vpow.pop %v1850
      %v1852 = vmul.f32 %v1845, 1.442695
      %v1853 = vpow.pop %v1852
      %v1854 = vsel %vm1645, %v1847, 0.0
      %1855 = vadd.xlane.f32.xlu0 %v1854
      %v1856 = vpop.xlane.xlu0 %1855
      %v1857 = vsel %vm1645, %v1849, 0.0
      %1858 = vadd.xlane.f32.xlu0 %v1857
      %v1859 = vpop.xlane.xlu0 %1858
      %v1860 = vsel %vm1645, %v1851, 0.0
      %1861 = vadd.xlane.f32.xlu0 %v1860
      %v1862 = vpop.xlane.xlu0 %1861
      %v1863 = vsel %vm1645, %v1853, 0.0
      %1864 = vadd.xlane.f32.xlu0 %v1863
      %v1865 = vpop.xlane.xlu0 %1864
      %v1866 = vrcp.pop %v1856
      %v1867 = vmul.f32 %v1847, %v1866
      %v1868 = vrcp.pop %v1859
      %v1869 = vmul.f32 %v1849, %v1868
      %v1870 = vrcp.pop %v1862
      %v1871 = vmul.f32 %v1851, %v1870
      %v1872 = vrcp.pop %v1865
      %v1873 = vmul.f32 %v1853, %v1872
      %v1874 = vpack.c.bf16 %v1867, %v1867
      %v1875 = vpack.c.bf16 %v1869, %v1869
      %v1876 = vpack.c.bf16 %v1871, %v1871
      %v1877 = vpack.c.bf16 %v1873, %v1873
      %v1878 = vpack.c.bf16 %v1368, %v1368
      %v1879 = vpack.c.bf16 %v1456, %v1456
      %v1880 = vpack.c.bf16 %v1544, %v1544
      %v1881 = vpack.c.bf16 %v1632, %v1632
      %v1883 = vsel %vm1645, %v1874, 0
      %vm1885 = vcmask 1043456
      %v1887 = vsel %vm1885, %v1878, 0
      %1889 = vmatprep.subr.bf16.mxu0 0
      %1890 = vmatpush1.bf16.msra.mxu0 %v1887
      %1891 = vmatprep.subr.bf16.mxu0 0
      %1892 = vmatpush1.bf16.msra.mxu0 0
      %1893 = vmatprep.subr.bf16.mxu0 0
      %1894 = vmatpush1.bf16.msra.mxu0 0
      %1895 = vmatprep.subr.bf16.mxu0 0
      %1896 = vmatpush1.bf16.msra.mxu0 0
      %1897 = vmatprep.subr.bf16.mxu0 0
      %1898 = vmatpush1.bf16.msra.mxu0 0
      %1899 = vmatprep.subr.bf16.mxu0 0
      %1900 = vmatpush1.bf16.msra.mxu0 0
      %1901 = vmatprep.subr.bf16.mxu0 0
      %1902 = vmatpush1.bf16.msra.mxu0 0
      %1903 = vmatprep.subr.bf16.mxu0 0
      %1904 = vmatpush1.bf16.msra.mxu0 0
      %1905 = vmatprep.subr.bf16.mxu0 0
      %1906 = vmatpush1.bf16.msra.mxu0 0
      %1907 = vmatprep.subr.bf16.mxu0 0
      %1908 = vmatpush1.bf16.msra.mxu0 0
      %1909 = vmatprep.subr.bf16.mxu0 0
      %1910 = vmatpush1.bf16.msra.mxu0 0
      %1911 = vmatprep.subr.bf16.mxu0 0
      %1912 = vmatpush1.bf16.msra.mxu0 0
      %1913 = vmatprep.subr.bf16.mxu0 0
      %1914 = vmatpush1.bf16.msra.mxu0 0
      %1915 = vmatprep.subr.bf16.mxu0 0
      %1916 = vmatpush1.bf16.msra.mxu0 0
      %1917 = vmatprep.subr.bf16.mxu0 0
      %1918 = vmatpush1.bf16.msra.mxu0 0
      %1919 = vmatprep.subr.bf16.mxu0 0
      %1920 = vmatpush1.bf16.msra.mxu0 0
      %1921 = vmatprep.mubr.bf16.mxu0 0
      %1922 = vmatmul.mubr.bf16.gmra.mrb[0].mxu0 %v1883
      %v1923 = vpop.f32.mrb[0].mxu0
      %v1924 = vadd.f32 0.0, %v1923
      %v1925 = vpop.f32.mrb[0].mxu0
      %v1926 = vpop.f32.mrb[0].mxu0
      %v1927 = vpop.f32.mrb[0].mxu0
      %1928 = vdwg.mxu0
      %v1930 = vsel %vm1645, %v1875, 0
      %v1933 = vsel %vm1885, %v1879, 0
      %1935 = vmatprep.subr.bf16.mxu0 0
      %1936 = vmatpush1.bf16.msra.mxu0 %v1933
      %1937 = vmatprep.subr.bf16.mxu0 0
      %1938 = vmatpush1.bf16.msra.mxu0 0
      %1939 = vmatprep.subr.bf16.mxu0 0
      %1940 = vmatpush1.bf16.msra.mxu0 0
      %1941 = vmatprep.subr.bf16.mxu0 0
      %1942 = vmatpush1.bf16.msra.mxu0 0
      %1943 = vmatprep.subr.bf16.mxu0 0
      %1944 = vmatpush1.bf16.msra.mxu0 0
      %1945 = vmatprep.subr.bf16.mxu0 0
      %1946 = vmatpush1.bf16.msra.mxu0 0
      %1947 = vmatprep.subr.bf16.mxu0 0
      %1948 = vmatpush1.bf16.msra.mxu0 0
      %1949 = vmatprep.subr.bf16.mxu0 0
      %1950 = vmatpush1.bf16.msra.mxu0 0
      %1951 = vmatprep.subr.bf16.mxu0 0
      %1952 = vmatpush1.bf16.msra.mxu0 0
      %1953 = vmatprep.subr.bf16.mxu0 0
      %1954 = vmatpush1.bf16.msra.mxu0 0
      %1955 = vmatprep.subr.bf16.mxu0 0
      %1956 = vmatpush1.bf16.msra.mxu0 0
      %1957 = vmatprep.subr.bf16.mxu0 0
      %1958 = vmatpush1.bf16.msra.mxu0 0
      %1959 = vmatprep.subr.bf16.mxu0 0
      %1960 = vmatpush1.bf16.msra.mxu0 0
      %1961 = vmatprep.subr.bf16.mxu0 0
      %1962 = vmatpush1.bf16.msra.mxu0 0
      %1963 = vmatprep.subr.bf16.mxu0 0
      %1964 = vmatpush1.bf16.msra.mxu0 0
      %1965 = vmatprep.subr.bf16.mxu0 0
      %1966 = vmatpush1.bf16.msra.mxu0 0
      %1967 = vmatprep.mubr.bf16.mxu0 0
      %1968 = vmatmul.mubr.bf16.gmra.mrb[0].mxu0 %v1930
      %v1969 = vpop.f32.mrb[0].mxu0
      %v1970 = vadd.f32 0.0, %v1969
      %v1971 = vpop.f32.mrb[0].mxu0
      %v1972 = vpop.f32.mrb[0].mxu0
      %v1973 = vpop.f32.mrb[0].mxu0
      %1974 = vdwg.mxu0
      %v1976 = vsel %vm1645, %v1876, 0
      %v1979 = vsel %vm1885, %v1880, 0
      %1981 = vmatprep.subr.bf16.mxu0 0
      %1982 = vmatpush1.bf16.msra.mxu0 %v1979
      %1983 = vmatprep.subr.bf16.mxu0 0
      %1984 = vmatpush1.bf16.msra.mxu0 0
      %1985 = vmatprep.subr.bf16.mxu0 0
      %1986 = vmatpush1.bf16.msra.mxu0 0
      %1987 = vmatprep.subr.bf16.mxu0 0
      %1988 = vmatpush1.bf16.msra.mxu0 0
      %1989 = vmatprep.subr.bf16.mxu0 0
      %1990 = vmatpush1.bf16.msra.mxu0 0
      %1991 = vmatprep.subr.bf16.mxu0 0
      %1992 = vmatpush1.bf16.msra.mxu0 0
      %1993 = vmatprep.subr.bf16.mxu0 0
      %1994 = vmatpush1.bf16.msra.mxu0 0
      %1995 = vmatprep.subr.bf16.mxu0 0
      %1996 = vmatpush1.bf16.msra.mxu0 0
      %1997 = vmatprep.subr.bf16.mxu0 0
      %1998 = vmatpush1.bf16.msra.mxu0 0
      %1999 = vmatprep.subr.bf16.mxu0 0
      %2000 = vmatpush1.bf16.msra.mxu0 0
      %2001 = vmatprep.subr.bf16.mxu0 0
      %2002 = vmatpush1.bf16.msra.mxu0 0
      %2003 = vmatprep.subr.bf16.mxu0 0
      %2004 = vmatpush1.bf16.msra.mxu0 0
      %2005 = vmatprep.subr.bf16.mxu0 0
      %2006 = vmatpush1.bf16.msra.mxu0 0
      %2007 = vmatprep.subr.bf16.mxu0 0
      %2008 = vmatpush1.bf16.msra.mxu0 0
      %2009 = vmatprep.subr.bf16.mxu0 0
      %2010 = vmatpush1.bf16.msra.mxu0 0
      %2011 = vmatprep.subr.bf16.mxu0 0
      %2012 = vmatpush1.bf16.msra.mxu0 0
      %2013 = vmatprep.mubr.bf16.mxu0 0
      %2014 = vmatmul.mubr.bf16.gmra.mrb[0].mxu0 %v1976
      %v2015 = vpop.f32.mrb[0].mxu0
      %v2016 = vadd.f32 0.0, %v2015
      %v2017 = vpop.f32.mrb[0].mxu0
      %v2018 = vpop.f32.mrb[0].mxu0
      %v2019 = vpop.f32.mrb[0].mxu0
      %2020 = vdwg.mxu0
      %v2022 = vsel %vm1645, %v1877, 0
      %v2025 = vsel %vm1885, %v1881, 0
      %2027 = vmatprep.subr.bf16.mxu0 0
      %2028 = vmatpush1.bf16.msra.mxu0 %v2025
      %2029 = vmatprep.subr.bf16.mxu0 0
      %2030 = vmatpush1.bf16.msra.mxu0 0
      %2031 = vmatprep.subr.bf16.mxu0 0
      %2032 = vmatpush1.bf16.msra.mxu0 0
      %2033 = vmatprep.subr.bf16.mxu0 0
      %2034 = vmatpush1.bf16.msra.mxu0 0
      %2035 = vmatprep.subr.bf16.mxu0 0
      %2036 = vmatpush1.bf16.msra.mxu0 0
      %2037 = vmatprep.subr.bf16.mxu0 0
      %2038 = vmatpush1.bf16.msra.mxu0 0
      %2039 = vmatprep.subr.bf16.mxu0 0
      %2040 = vmatpush1.bf16.msra.mxu0 0
      %2041 = vmatprep.subr.bf16.mxu0 0
      %2042 = vmatpush1.bf16.msra.mxu0 0
      %2043 = vmatprep.subr.bf16.mxu0 0
      %2044 = vmatpush1.bf16.msra.mxu0 0
      %2045 = vmatprep.subr.bf16.mxu0 0
      %2046 = vmatpush1.bf16.msra.mxu0 0
      %2047 = vmatprep.subr.bf16.mxu0 0
      %2048 = vmatpush1.bf16.msra.mxu0 0
      %2049 = vmatprep.subr.bf16.mxu0 0
      %2050 = vmatpush1.bf16.msra.mxu0 0
      %2051 = vmatprep.subr.bf16.mxu0 0
      %2052 = vmatpush1.bf16.msra.mxu0 0
      %2053 = vmatprep.subr.bf16.mxu0 0
      %2054 = vmatpush1.bf16.msra.mxu0 0
      %2055 = vmatprep.subr.bf16.mxu0 0
      %2056 = vmatpush1.bf16.msra.mxu0 0
      %2057 = vmatprep.subr.bf16.mxu0 0
      %2058 = vmatpush1.bf16.msra.mxu0 0
      %2059 = vmatprep.mubr.bf16.mxu0 0
      %2060 = vmatmul.mubr.bf16.gmra.mrb[0].mxu0 %v2022
      %v2061 = vpop.f32.mrb[0].mxu0
      %v2062 = vadd.f32 0.0, %v2061
      %v2063 = vpop.f32.mrb[0].mxu0
      %v2064 = vpop.f32.mrb[0].mxu0
      %v2065 = vpop.f32.mrb[0].mxu0
      %2066 = vdwg.mxu0
      %v2067 = vpack.c.bf16 %v1924, %v1924
      %v2068 = vpack.c.bf16 %v1970, %v1970
      %v2069 = vpack.c.bf16 %v2016, %v2016
      %v2070 = vpack.c.bf16 %v2062, %v2062
      %v2071 = vld [vmem:[%s2] sm:$0xf]
      %v2072 = vld [vmem:[%s2 + $0x4] sm:$0xf]
      %v2073 = vld [vmem:[%s2 + $0x8] sm:$0xf]
      %v2074 = vld [vmem:[%s2 + $0xc] sm:$0xf]
      %v2076 = vsel %vm1645, %v2067, 0
      %v2079 = vsel %vm1885, %v2071, 0
      %2081 = vmatprep.subr.bf16.mxu0 0
      %2082 = vmatpush1.bf16.msra.mxu0 %v2079
      %2083 = vmatprep.subr.bf16.mxu0 0
      %2084 = vmatpush1.bf16.msra.mxu0 0
      %2085 = vmatprep.subr.bf16.mxu0 0
      %2086 = vmatpush1.bf16.msra.mxu0 0
      %2087 = vmatprep.subr.bf16.mxu0 0
      %2088 = vmatpush1.bf16.msra.mxu0 0
      %2089 = vmatprep.subr.bf16.mxu0 0
      %2090 = vmatpush1.bf16.msra.mxu0 0
      %2091 = vmatprep.subr.bf16.mxu0 0
      %2092 = vmatpush1.bf16.msra.mxu0 0
      %2093 = vmatprep.subr.bf16.mxu0 0
      %2094 = vmatpush1.bf16.msra.mxu0 0
      %2095 = vmatprep.subr.bf16.mxu0 0
      %2096 = vmatpush1.bf16.msra.mxu0 0
      %2097 = vmatprep.subr.bf16.mxu0 0
      %2098 = vmatpush1.bf16.msra.mxu0 0
      %2099 = vmatprep.subr.bf16.mxu0 0
      %2100 = vmatpush1.bf16.msra.mxu0 0
      %2101 = vmatprep.subr.bf16.mxu0 0
      %2102 = vmatpush1.bf16.msra.mxu0 0
      %2103 = vmatprep.subr.bf16.mxu0 0
      %2104 = vmatpush1.bf16.msra.mxu0 0
      %2105 = vmatprep.subr.bf16.mxu0 0
      %2106 = vmatpush1.bf16.msra.mxu0 0
      %2107 = vmatprep.subr.bf16.mxu0 0
      %2108 = vmatpush1.bf16.msra.mxu0 0
      %2109 = vmatprep.subr.bf16.mxu0 0
      %2110 = vmatpush1.bf16.msra.mxu0 0
      %2111 = vmatprep.subr.bf16.mxu0 0
      %2112 = vmatpush1.bf16.msra.mxu0 0
      %2113 = vmatprep.mubr.bf16.mxu0 0
      %2114 = vmatmul.mubr.bf16.gmra.mrb[0].mxu0 %v2076
      %v2115 = vpop.f32.mrb[0].mxu0
      %v2116 = vadd.f32 0.0, %v2115
      %v2117 = vpop.f32.mrb[0].mxu0
      %v2118 = vpop.f32.mrb[0].mxu0
      %v2119 = vpop.f32.mrb[0].mxu0
      %2120 = vdwg.mxu0
      %v2122 = vsel %vm1645, %v2068, 0
      %v2125 = vsel %vm1885, %v2072, 0
      %2127 = vmatprep.subr.bf16.mxu0 0
      %2128 = vmatpush1.bf16.msra.mxu0 %v2125
      %2129 = vmatprep.subr.bf16.mxu0 0
      %2130 = vmatpush1.bf16.msra.mxu0 0
      %2131 = vmatprep.subr.bf16.mxu0 0
      %2132 = vmatpush1.bf16.msra.mxu0 0
      %2133 = vmatprep.subr.bf16.mxu0 0
      %2134 = vmatpush1.bf16.msra.mxu0 0
      %2135 = vmatprep.subr.bf16.mxu0 0
      %2136 = vmatpush1.bf16.msra.mxu0 0
      %2137 = vmatprep.subr.bf16.mxu0 0
      %2138 = vmatpush1.bf16.msra.mxu0 0
      %2139 = vmatprep.subr.bf16.mxu0 0
      %2140 = vmatpush1.bf16.msra.mxu0 0
      %2141 = vmatprep.subr.bf16.mxu0 0
      %2142 = vmatpush1.bf16.msra.mxu0 0
      %2143 = vmatprep.subr.bf16.mxu0 0
      %2144 = vmatpush1.bf16.msra.mxu0 0
      %2145 = vmatprep.subr.bf16.mxu0 0
      %2146 = vmatpush1.bf16.msra.mxu0 0
      %2147 = vmatprep.subr.bf16.mxu0 0
      %2148 = vmatpush1.bf16.msra.mxu0 0
      %2149 = vmatprep.subr.bf16.mxu0 0
      %2150 = vmatpush1.bf16.msra.mxu0 0
      %2151 = vmatprep.subr.bf16.mxu0 0
      %2152 = vmatpush1.bf16.msra.mxu0 0
      %2153 = vmatprep.subr.bf16.mxu0 0
      %2154 = vmatpush1.bf16.msra.mxu0 0
      %2155 = vmatprep.subr.bf16.mxu0 0
      %2156 = vmatpush1.bf16.msra.mxu0 0
      %2157 = vmatprep.subr.bf16.mxu0 0
      %2158 = vmatpush1.bf16.msra.mxu0 0
      %2159 = vmatprep.mubr.bf16.mxu0 0
      %2160 = vmatmul.mubr.bf16.gmra.mrb[0].mxu0 %v2122
      %v2161 = vpop.f32.mrb[0].mxu0
      %v2162 = vadd.f32 0.0, %v2161
      %v2163 = vpop.f32.mrb[0].mxu0
      %v2164 = vpop.f32.mrb[0].mxu0
      %v2165 = vpop.f32.mrb[0].mxu0
      %2166 = vdwg.mxu0
      %v2168 = vsel %vm1645, %v2069, 0
      %v2171 = vsel %vm1885, %v2073, 0
      %2173 = vmatprep.subr.bf16.mxu0 0
      %2174 = vmatpush1.bf16.msra.mxu0 %v2171
      %2175 = vmatprep.subr.bf16.mxu0 0
      %2176 = vmatpush1.bf16.msra.mxu0 0
      %2177 = vmatprep.subr.bf16.mxu0 0
      %2178 = vmatpush1.bf16.msra.mxu0 0
      %2179 = vmatprep.subr.bf16.mxu0 0
      %2180 = vmatpush1.bf16.msra.mxu0 0
      %2181 = vmatprep.subr.bf16.mxu0 0
      %2182 = vmatpush1.bf16.msra.mxu0 0
      %2183 = vmatprep.subr.bf16.mxu0 0
      %2184 = vmatpush1.bf16.msra.mxu0 0
      %2185 = vmatprep.subr.bf16.mxu0 0
      %2186 = vmatpush1.bf16.msra.mxu0 0
      %2187 = vmatprep.subr.bf16.mxu0 0
      %2188 = vmatpush1.bf16.msra.mxu0 0
      %2189 = vmatprep.subr.bf16.mxu0 0
      %2190 = vmatpush1.bf16.msra.mxu0 0
      %2191 = vmatprep.subr.bf16.mxu0 0
      %2192 = vmatpush1.bf16.msra.mxu0 0
      %2193 = vmatprep.subr.bf16.mxu0 0
      %2194 = vmatpush1.bf16.msra.mxu0 0
      %2195 = vmatprep.subr.bf16.mxu0 0
      %2196 = vmatpush1.bf16.msra.mxu0 0
      %2197 = vmatprep.subr.bf16.mxu0 0
      %2198 = vmatpush1.bf16.msra.mxu0 0
      %2199 = vmatprep.subr.bf16.mxu0 0
      %2200 = vmatpush1.bf16.msra.mxu0 0
      %2201 = vmatprep.subr.bf16.mxu0 0
      %2202 = vmatpush1.bf16.msra.mxu0 0
      %2203 = vmatprep.subr.bf16.mxu0 0
      %2204 = vmatpush1.bf16.msra.mxu0 0
      %2205 = vmatprep.mubr.bf16.mxu0 0
      %2206 = vmatmul.mubr.bf16.gmra.mrb[0].mxu0 %v2168
      %v2207 = vpop.f32.mrb[0].mxu0
      %v2208 = vadd.f32 0.0, %v2207
      %v2209 = vpop.f32.mrb[0].mxu0
      %v2210 = vpop.f32.mrb[0].mxu0
      %v2211 = vpop.f32.mrb[0].mxu0
      %2212 = vdwg.mxu0
      %v2214 = vsel %vm1645, %v2070, 0
      %v2217 = vsel %vm1885, %v2074, 0
      %2219 = vmatprep.subr.bf16.mxu0 0
      %2220 = vmatpush1.bf16.msra.mxu0 %v2217
      %2221 = vmatprep.subr.bf16.mxu0 0
      %2222 = vmatpush1.bf16.msra.mxu0 0
      %2223 = vmatprep.subr.bf16.mxu0 0
      %2224 = vmatpush1.bf16.msra.mxu0 0
      %2225 = vmatprep.subr.bf16.mxu0 0
      %2226 = vmatpush1.bf16.msra.mxu0 0
      %2227 = vmatprep.subr.bf16.mxu0 0
      %2228 = vmatpush1.bf16.msra.mxu0 0
      %2229 = vmatprep.subr.bf16.mxu0 0
      %2230 = vmatpush1.bf16.msra.mxu0 0
      %2231 = vmatprep.subr.bf16.mxu0 0
      %2232 = vmatpush1.bf16.msra.mxu0 0
      %2233 = vmatprep.subr.bf16.mxu0 0
      %2234 = vmatpush1.bf16.msra.mxu0 0
      %2235 = vmatprep.subr.bf16.mxu0 0
      %2236 = vmatpush1.bf16.msra.mxu0 0
      %2237 = vmatprep.subr.bf16.mxu0 0
      %2238 = vmatpush1.bf16.msra.mxu0 0
      %2239 = vmatprep.subr.bf16.mxu0 0
      %2240 = vmatpush1.bf16.msra.mxu0 0
      %2241 = vmatprep.subr.bf16.mxu0 0
      %2242 = vmatpush1.bf16.msra.mxu0 0
      %2243 = vmatprep.subr.bf16.mxu0 0
      %2244 = vmatpush1.bf16.msra.mxu0 0
      %2245 = vmatprep.subr.bf16.mxu0 0
      %2246 = vmatpush1.bf16.msra.mxu0 0
      %2247 = vmatprep.subr.bf16.mxu0 0
      %2248 = vmatpush1.bf16.msra.mxu0 0
      %2249 = vmatprep.subr.bf16.mxu0 0
      %2250 = vmatpush1.bf16.msra.mxu0 0
      %2251 = vmatprep.mubr.bf16.mxu0 0
      %2252 = vmatmul.mubr.bf16.gmra.mrb[0].mxu0 %v2214
      %v2253 = vpop.f32.mrb[0].mxu0
      %v2254 = vadd.f32 0.0, %v2253
      %v2255 = vpop.f32.mrb[0].mxu0
      %v2256 = vpop.f32.mrb[0].mxu0
      %v2257 = vpop.f32.mrb[0].mxu0
      %2258 = vdwg.mxu0
      %v2259 = vadd.f32 %v2116, %v2162
      %v2260 = vadd.f32 %v2259, %v2208
      %v2261 = vadd.f32 %v2260, %v2254
      %v2262 = vlaneseq
      %v2263 = vshrl.u32 %v2262, 7
      %v2264 = vsub.s32 4, %v2263
      %v2265 = vrot.slane %v276, %v2264
      %v2266 = vadd.f32 %v2261, %v2265
      %v2267 = vadd.f32 %v2266, %v275
      %2268 = vadd.xlane.f32.xlu0 %v2267
      %v2269 = vpop.xlane.xlu0 %2268
      %v2270 = vmul.f32 %v2269, 0.03125
      %v2271 = vmul.f32 %v2267, %v2267
      %2272 = vadd.xlane.f32.xlu0 %v2271
      %v2273 = vpop.xlane.xlu0 %2272
      %v2274 = vmul.f32 %v2273, 0.03125
      %v2275 = vmul.f32 %v2270, %v2270
      %v2276 = vsub.f32 %v2274, %v2275
      %v2277 = vsub.f32 %v2267, %v2270
      %v2278 = vadd.f32 %v2276, 1e-06
      %v2279 = vrsqrt.pop %v2278
      %v2280 = vmul.f32 %v2277, %v2279
      %v2281 = vlaneseq
      %v2282 = vshrl.u32 %v2281, 7
      %v2283 = vsub.s32 2, %v2282
      %v2284 = vrot.slane %v276, %v2283
      %v2285 = vmul.f32 %v2280, %v2284
      %v2286 = vlaneseq
      %v2287 = vshrl.u32 %v2286, 7
      %v2288 = vsub.s32 3, %v2287
      %v2289 = vrot.slane %v276, %v2288
      %v2290 = vadd.f32 %v2285, %v2289
      %v2291 = vpack.c.bf16 %v2290, %v2290
      %v2292 = vld [vmem:[%s3] sm:$0xf]
      %v2293 = vld [vmem:[%s3 + $0x4] sm:$0xf]
      %v2294 = vld [vmem:[%s3 + $0x8] sm:$0xf]
      %v2295 = vld [vmem:[%s3 + $0xc] sm:$0xf]
      %v2296 = vld [vmem:[%s3 + $0x10] sm:$0xf]
      %v2297 = vld [vmem:[%s3 + $0x14] sm:$0xf]
      %v2298 = vld [vmem:[%s3 + $0x18] sm:$0xf]
      %v2299 = vld [vmem:[%s3 + $0x1c] sm:$0xf]
      %v2300 = vld [vmem:[%s3 + $0x20] sm:$0xf]
      %v2301 = vld [vmem:[%s3 + $0x24] sm:$0xf]
      %v2302 = vld [vmem:[%s3 + $0x28] sm:$0xf]
      %v2303 = vld [vmem:[%s3 + $0x2c] sm:$0xf]
      %v2304 = vld [vmem:[%s3 + $0x30] sm:$0xf]
      %v2305 = vld [vmem:[%s3 + $0x34] sm:$0xf]
      %v2306 = vld [vmem:[%s3 + $0x38] sm:$0xf]
      %v2307 = vld [vmem:[%s3 + $0x3c] sm:$0xf]
      %v2308 = vlaneseq
      %v2309 = vshrl.u32 %v2308, 7
      %v2310 = vsub.s32 5, %v2309
      %v2311 = vrot.slane %v276, %v2310
      %v2328 = vunpack.c.l.b16 %v2292
      %v2329 = vunpack.c.l.b16 %v2293
      %v2330 = vunpack.c.l.b16 %v2294
      %v2331 = vunpack.c.l.b16 %v2295
      %v2332 = vunpack.c.l.b16 %v2296
      %v2333 = vunpack.c.l.b16 %v2297
      %v2334 = vunpack.c.l.b16 %v2298
      %v2335 = vunpack.c.l.b16 %v2299
      %v2336 = vunpack.c.l.b16 %v2300
      %v2337 = vunpack.c.l.b16 %v2301
      %v2338 = vunpack.c.l.b16 %v2302
      %v2339 = vunpack.c.l.b16 %v2303
      %v2340 = vunpack.c.l.b16 %v2304
      %v2341 = vunpack.c.l.b16 %v2305
      %v2342 = vunpack.c.l.b16 %v2306
      %v2343 = vunpack.c.l.b16 %v2307
      %v2344 = vpack.c.b16 %v2329, %v2328
      %v2345 = vpack.c.b16 %v2331, %v2330
      %v2346 = vpack.c.b16 %v2333, %v2332
      %v2347 = vpack.c.b16 %v2335, %v2334
      %v2348 = vpack.c.b16 %v2337, %v2336
      %v2349 = vpack.c.b16 %v2339, %v2338
      %v2350 = vpack.c.b16 %v2341, %v2340
      %v2351 = vpack.c.b16 %v2343, %v2342
      %2360 = vmatprep.subr.bf16.mxu0 0
      %2361 = vmatpush1.bf16.msra.mxu0 %v2344
      %2362 = vmatprep.subr.bf16.mxu0 0
      %2363 = vmatpush1.bf16.msra.mxu0 %v2345
      %2364 = vmatprep.subr.bf16.mxu0 0
      %2365 = vmatpush1.bf16.msra.mxu0 %v2346
      %2366 = vmatprep.subr.bf16.mxu0 0
      %2367 = vmatpush1.bf16.msra.mxu0 %v2347
      %2368 = vmatprep.subr.bf16.mxu0 0
      %2369 = vmatpush1.bf16.msra.mxu0 %v2348
      %2370 = vmatprep.subr.bf16.mxu0 0
      %2371 = vmatpush1.bf16.msra.mxu0 %v2349
      %2372 = vmatprep.subr.bf16.mxu0 0
      %2373 = vmatpush1.bf16.msra.mxu0 %v2350
      %2374 = vmatprep.subr.bf16.mxu0 0
      %2375 = vmatpush1.bf16.msra.mxu0 %v2351
      %2376 = vmatprep.subr.bf16.mxu0 0
      %2377 = vmatpush1.bf16.msra.mxu0 0
      %2378 = vmatprep.subr.bf16.mxu0 0
      %2379 = vmatpush1.bf16.msra.mxu0 0
      %2380 = vmatprep.subr.bf16.mxu0 0
      %2381 = vmatpush1.bf16.msra.mxu0 0
      %2382 = vmatprep.subr.bf16.mxu0 0
      %2383 = vmatpush1.bf16.msra.mxu0 0
      %2384 = vmatprep.subr.bf16.mxu0 0
      %2385 = vmatpush1.bf16.msra.mxu0 0
      %2386 = vmatprep.subr.bf16.mxu0 0
      %2387 = vmatpush1.bf16.msra.mxu0 0
      %2388 = vmatprep.subr.bf16.mxu0 0
      %2389 = vmatpush1.bf16.msra.mxu0 0
      %2390 = vmatprep.subr.bf16.mxu0 0
      %2391 = vmatpush1.bf16.msra.mxu0 0
      %2392 = vmatprep.mubr.bf16.mxu0 0
      %2393 = vmatmul.mubr.bf16.gmra.mrb[0].mxu0 %v2291
      %v2394 = vpop.f32.mrb[0].mxu0
      %v2395 = vadd.f32 %v2311, %v2394
      %v2396 = vpop.f32.mrb[0].mxu0
      %v2397 = vpop.f32.mrb[0].mxu0
      %v2398 = vpop.f32.mrb[0].mxu0
      %2399 = vdwg.mxu0
      %v2400 = vmul.f32 %v2395, 0.5
      %v2401 = vmul.f32 %v2395, 0.70710677
      %v2402 = vand.u32 2147483647, %v2401
      %v2403 = vmul.f32 %v2402, 0.3275911
      %v2404 = vadd.f32 %v2403, 1.0
      %v2405 = vrcp.pop %v2404
      %v2406 = vmul.f32 1.0, %v2405
      %v2407 = vmul.f32 %v2406, 1.0614054
      %v2408 = vadd.f32 %v2407, -1.4531521
      %v2409 = vmul.f32 %v2408, %v2406
      %v2410 = vadd.f32 %v2409, 1.4214138
      %v2411 = vmul.f32 %v2410, %v2406
      %v2412 = vadd.f32 %v2411, -0.28449672
      %v2413 = vmul.f32 %v2412, %v2406
      %v2414 = vadd.f32 %v2413, 0.2548296
      %v2415 = vmul.f32 %v2414, %v2406
      %v2416 = vsub.f32 0.0, %v2402
      %v2417 = vmul.f32 %v2416, %v2402
      %v2418 = vmul.f32 %v2417, 1.442695
      %v2419 = vpow.pop %v2418
      %v2420 = vmul.f32 %v2415, %v2419
      %v2421 = vsub.f32 1.0, %v2420
      %vm2422 = vcmp.ge.f32.partialorder %v2401, 0.0
      %v2423 = vsub.f32 0.0, %v2421
      %v2424 = vsel %vm2422, %v2421, %v2423
      %v2425 = vadd.f32 %v2424, 1.0
      %v2426 = vmul.f32 %v2400, %v2425
      %v2427 = vpack.c.bf16 %v2426, %v2426
      %v2428 = vld [vmem:[%s4] sm:$0xf]
      %v2429 = vld [vmem:[%s4 + $0x4] sm:$0xf]
      %v2430 = vld [vmem:[%s4 + $0x8] sm:$0xf]
      %v2431 = vld [vmem:[%s4 + $0xc] sm:$0xf]
      %v2432 = vld [vmem:[%s4 + $0x10] sm:$0xf]
      %v2433 = vld [vmem:[%s4 + $0x14] sm:$0xf]
      %v2434 = vld [vmem:[%s4 + $0x18] sm:$0xf]
      %v2435 = vld [vmem:[%s4 + $0x1c] sm:$0xf]
      %v2436 = vld [vmem:[%s4 + $0x20] sm:$0xf]
      %v2437 = vld [vmem:[%s4 + $0x24] sm:$0xf]
      %v2438 = vld [vmem:[%s4 + $0x28] sm:$0xf]
      %v2439 = vld [vmem:[%s4 + $0x2c] sm:$0xf]
      %v2440 = vld [vmem:[%s4 + $0x30] sm:$0xf]
      %v2441 = vld [vmem:[%s4 + $0x34] sm:$0xf]
      %v2442 = vld [vmem:[%s4 + $0x38] sm:$0xf]
      %v2443 = vld [vmem:[%s4 + $0x3c] sm:$0xf]
      %v2444 = vlaneseq
      %v2445 = vshrl.u32 %v2444, 7
      %v2446 = vsub.s32 6, %v2445
      %v2447 = vrot.slane %v276, %v2446
      %v2464 = vunpack.c.l.b16 %v2428
      %v2465 = vunpack.c.l.b16 %v2429
      %v2466 = vunpack.c.l.b16 %v2430
      %v2467 = vunpack.c.l.b16 %v2431
      %v2468 = vunpack.c.l.b16 %v2432
      %v2469 = vunpack.c.l.b16 %v2433
      %v2470 = vunpack.c.l.b16 %v2434
      %v2471 = vunpack.c.l.b16 %v2435
      %v2472 = vunpack.c.l.b16 %v2436
      %v2473 = vunpack.c.l.b16 %v2437
      %v2474 = vunpack.c.l.b16 %v2438
      %v2475 = vunpack.c.l.b16 %v2439
      %v2476 = vunpack.c.l.b16 %v2440
      %v2477 = vunpack.c.l.b16 %v2441
      %v2478 = vunpack.c.l.b16 %v2442
      %v2479 = vunpack.c.l.b16 %v2443
      %v2480 = vpack.c.b16 %v2465, %v2464
      %v2481 = vpack.c.b16 %v2467, %v2466
      %v2482 = vpack.c.b16 %v2469, %v2468
      %v2483 = vpack.c.b16 %v2471, %v2470
      %v2484 = vpack.c.b16 %v2473, %v2472
      %v2485 = vpack.c.b16 %v2475, %v2474
      %v2486 = vpack.c.b16 %v2477, %v2476
      %v2487 = vpack.c.b16 %v2479, %v2478
      %2496 = vmatprep.subr.bf16.mxu0 0
      %2497 = vmatpush1.bf16.msra.mxu0 %v2480
      %2498 = vmatprep.subr.bf16.mxu0 0
      %2499 = vmatpush1.bf16.msra.mxu0 %v2481
      %2500 = vmatprep.subr.bf16.mxu0 0
      %2501 = vmatpush1.bf16.msra.mxu0 %v2482
      %2502 = vmatprep.subr.bf16.mxu0 0
      %2503 = vmatpush1.bf16.msra.mxu0 %v2483
      %2504 = vmatprep.subr.bf16.mxu0 0
      %2505 = vmatpush1.bf16.msra.mxu0 %v2484
      %2506 = vmatprep.subr.bf16.mxu0 0
      %2507 = vmatpush1.bf16.msra.mxu0 %v2485
      %2508 = vmatprep.subr.bf16.mxu0 0
      %2509 = vmatpush1.bf16.msra.mxu0 %v2486
      %2510 = vmatprep.subr.bf16.mxu0 0
      %2511 = vmatpush1.bf16.msra.mxu0 %v2487
      %2512 = vmatprep.subr.bf16.mxu0 0
      %2513 = vmatpush1.bf16.msra.mxu0 0
      %2514 = vmatprep.subr.bf16.mxu0 0
      %2515 = vmatpush1.bf16.msra.mxu0 0
      %2516 = vmatprep.subr.bf16.mxu0 0
      %2517 = vmatpush1.bf16.msra.mxu0 0
      %2518 = vmatprep.subr.bf16.mxu0 0
      %2519 = vmatpush1.bf16.msra.mxu0 0
      %2520 = vmatprep.subr.bf16.mxu0 0
      %2521 = vmatpush1.bf16.msra.mxu0 0
      %2522 = vmatprep.subr.bf16.mxu0 0
      %2523 = vmatpush1.bf16.msra.mxu0 0
      %2524 = vmatprep.subr.bf16.mxu0 0
      %2525 = vmatpush1.bf16.msra.mxu0 0
      %2526 = vmatprep.subr.bf16.mxu0 0
      %2527 = vmatpush1.bf16.msra.mxu0 0
      %2528 = vmatprep.mubr.bf16.mxu0 0
      %2529 = vmatmul.mubr.bf16.gmra.mrb[0].mxu0 %v2427
      %v2530 = vpop.f32.mrb[0].mxu0
      %v2531 = vadd.f32 %v2447, %v2530
      %v2532 = vpop.f32.mrb[0].mxu0
      %v2533 = vpop.f32.mrb[0].mxu0
      %v2534 = vpop.f32.mrb[0].mxu0
      %2535 = vdwg.mxu0
      %v2536 = vadd.f32 %v2531, %v2267
      %2537 = vst [vmem:[%s273] sm:$0xff] %v2536
      %p2538 = scmp.lt.s32.totalorder %s18, 1
      %s2539 = scalar_select %p2538, %s18, 1
      %s2540 = smul.addr %s2539, 8
      %s2541 = scalar_lea.vmem %s7, %s2540
      // Predicated region
      $region49: #{transformer_encoder_block.1} parent=47 // pred_check
        %p2542 = pneg %p188
      $region50: #{transformer_encoder_block.1} parent=47 // pred_check_branch
        %2544 = sbr.rel (%p2542) target = $region52
      $region51: #{transformer_encoder_block.1} parent=47 // pred_region
        _
      $region52: #{transformer_encoder_block.1} parent=47 // pred_fallthru
        _
    $region48: #{transformer_encoder_block.1} parent=5 // pred_fallthru
      _
    %p2545 = scmp.le.s32.totalorder 2, %s13
    // Predicated region
    $region53: #{transformer_encoder_block.1} parent=5 // pred_check
      %p2546 = pneg %p2545
    $region54: #{transformer_encoder_block.1} parent=5 // pred_check_branch
      %2548 = sbr.rel (%p2546) target = $region56
    $region55: #{transformer_encoder_block.1} parent=5 // pred_region
      %s2549 = ssub.s32 %s13, 2
      // Predicated region
      $region57: #{transformer_encoder_block.1} parent=55 // pred_check
        %p2550 = pneg %p194
      $region58: #{transformer_encoder_block.1} parent=55 // pred_check_branch
        %2552 = sbr.rel (%p2550) target = $region60
      $region59: #{transformer_encoder_block.1} parent=55 // pred_region
        %p2553 = scmp.lt.s32.totalorder %s19, 1
        %s2554 = scalar_select %p2553, %s19, 1
        %s2555 = smul.addr %s2554, 8
        %s2556 = scalar_lea.vmem %s7, %s2555
      $region60: #{transformer_encoder_block.1} parent=55 // pred_fallthru
        _
    $region56: #{transformer_encoder_block.1} parent=5 // pred_fallthru
      _
  $region6: #{transformer_encoder_block.1} parent=0 // loop_footer
    %s17 = sadd.s32 1, %s13
  $region7: #{transformer_encoder_block.1} parent=0 // loop_footer_branch
    %12 = sbr.rel target = $region3
  $region8: #{transformer_encoder_block.1} parent=0 // loop_exit
    _

</llo_original>
